<compile_context>
chip_gen: v7x
topology: tpu7x:2x2x1
jax: 0.10.0
libtpu: 0.0.40
codegen_flags: <defaults>
</compile_context>

<pallas_src>
import functools

import numpy as np
import jax
import jax.numpy as jnp
from jax.experimental import pallas as pl
from jax.experimental.pallas import tpu as pltpu


# -----------------------------------------------------------------------------
# Frequency-mode selection (identical to the PyTorch helper).
# -----------------------------------------------------------------------------
def get_frequency_modes(seq_len, modes=64, mode_select_method='lowest'):
    modes = min(modes, seq_len // 2)
    if mode_select_method == 'random':
        index = list(range(0, seq_len // 2))
        np.random.shuffle(index)
        index = index[:modes]
    elif mode_select_method == 'higher':
        index = list(range(modes // 4, modes // 4 * 3))
    else:
        index = list(range(0, modes))
    index.sort()
    return index


def _round_up(x, m):
    return (x + m - 1) // m * m


# -----------------------------------------------------------------------------
# Host-side constant matrices (built once in float64, shipped as bf16).
# -----------------------------------------------------------------------------
def _dft_basis(seq_len, padded_len, index, dtype=jnp.bfloat16):
    # x @ basis == [Re(rfft(x)) | Im(rfft(x))] at the selected bins.
    # Rows >= seq_len are zero so the zero-padded tail contributes nothing.
    t = np.arange(seq_len, dtype=np.float64)[:, None]
    j = np.asarray(index, dtype=np.float64)[None, :]
    ang = 2.0 * np.pi * t * j / seq_len
    basis = np.concatenate([np.cos(ang), -np.sin(ang)], axis=1)      # (L, 2M)
    if padded_len > seq_len:
        basis = np.concatenate(
            [basis, np.zeros((padded_len - seq_len, basis.shape[1]))], axis=0)
    return jnp.asarray(basis, dtype)


def _idft_basis(seq_len, padded_len, index, scale, dtype=jnp.bfloat16):
    # [Re | Im] @ basis == irfft of a spectrum that is zero except at the
    # selected bins, times `scale` (= 1/modes^2 folded in on the host).
    # Columns >= seq_len are sliced away by the wrapper.
    j = np.asarray(index, dtype=np.int64)[:, None]
    n = np.arange(padded_len, dtype=np.float64)[None, :]
    ang = 2.0 * np.pi * j.astype(np.float64) * n / seq_len
    nyq = seq_len // 2 if seq_len % 2 == 0 else -1
    w = np.where((j == 0) | (j == nyq), 1.0, 2.0)
    ic = w * np.cos(ang) / seq_len            # weights for the real part
    isn = -w * np.sin(ang) / seq_len          # weights for the imaginary part
    return jnp.asarray(np.concatenate([ic, isn], axis=0) * scale, dtype)


def _complex_weight_block(w_real, w_imag, dtype=jnp.bfloat16):
    # weights1[h, e_in, o, x]  ->  per-(head, channel) real 2Mx2M block
    # [[Wr, Wi], [-Wi, Wr]] acting on row vectors [v_r | v_i].
    wr = jnp.transpose(w_real, (0, 3, 1, 2))      # (H, E, M_in, M_out)
    wi = jnp.transpose(w_imag, (0, 3, 1, 2))
    top = jnp.concatenate([wr, wi], axis=-1)      # (H, E, M, 2M)
    bot = jnp.concatenate([-wi, wr], axis=-1)
    blk = jnp.concatenate([top, bot], axis=-2)    # (H, E, 2M, 2M)
    H, E, M2, _ = blk.shape
    return blk.reshape(H * E, M2, M2).astype(dtype)


# -----------------------------------------------------------------------------
# In-kernel helpers (all matmuls: bf16 inputs, f32 accumulation on the MXU).
# -----------------------------------------------------------------------------
def _mm(a, b):            # (m, k) @ (k, n) -> (m, n)
    return jax.lax.dot_general(a, b, (((1,), (0,)), ((), ())),
                               preferred_element_type=jnp.float32)


def _bmm_nt(a, b):        # (G, m, k) x (G, n, k) -> (G, m, n)
    return jax.lax.dot_general(a, b, (((2,), (2,)), ((0,), (0,))),
                               preferred_element_type=jnp.float32)


def _bmm_nn(a, b):        # (G, m, k) x (G, k, n) -> (G, m, n)
    return jax.lax.dot_general(a, b, (((2,), (1,)), ((0,), (0,))),
                               preferred_element_type=jnp.float32)


_INV_TWO_PI = 1.0 / (2.0 * np.pi)
_TWO_PI_HI = 6.28125                          # exactly representable
_TWO_PI_LO = 2.0 * np.pi - 6.28125            # Cody-Waite low word


def _sin_cos(y):
    # sin/cos via Cody-Waite range reduction + Taylor polynomials (VPU only).
    k = jnp.floor(y * _INV_TWO_PI + 0.5)
    r = (y - k * _TWO_PI_HI) - k * _TWO_PI_LO
    r2 = r * r
    sin_c = [-1.0 / 6, 1.0 / 120, -1.0 / 5040, 1.0 / 362880,
             -1.0 / 39916800, 1.0 / 6227020800, -1.0 / 1307674368000]
    s = sin_c[-1]
    for c in reversed(sin_c[:-1]):
        s = c + r2 * s
    sin_r = r * (1.0 + r2 * s)
    cos_c = [-0.5, 1.0 / 24, -1.0 / 720, 1.0 / 40320,
             -1.0 / 3628800, 1.0 / 479001600, -1.0 / 87178291200]
    cv = cos_c[-1]
    for c in reversed(cos_c[:-1]):
        cv = c + r2 * cv
    cos_r = 1.0 + r2 * cv
    return sin_r, cos_r


# -----------------------------------------------------------------------------
# The Pallas kernel: one (Hb-head block, Bb-batch block) slice per grid step.
# -----------------------------------------------------------------------------
def _fourier_cross_attn_kernel(xq_ref, xk_ref, fq_ref, fk_ref, wb_ref, ib_ref,
                               out_ref, vt_ref, osc_ref, *, heads, channels):
    Bb, N, Lqp = xq_ref.shape                    # N = Hb * E
    Lkp = xk_ref.shape[-1]
    M2 = fq_ref.shape[-1]                        # 2 * modes
    M = M2 // 2
    Hb, E = heads, channels
    G = Bb * Hb                                  # per-(batch, head) groups

    # --- 1) forward DFT at the selected modes (fused [Re | Im] basis) --------
    xq = xq_ref[...].reshape(Bb * N, Lqp)
    xk = xk_ref[...].reshape(Bb * N, Lkp)
    sq = _mm(xq, fq_ref[...]).reshape(G, E, M2)            # f32  [q_r | q_i]
    sk = _mm(xk, fk_ref[...]).reshape(G, E, M2)            # f32  [k_r | k_i]

    q_cat = sq.astype(jnp.bfloat16)
    sk_b = sk.astype(jnp.bfloat16)
    k_r = sk_b[..., :M]
    k_i = sk_b[..., M:]

    # --- 2) per-(batch, head) complex Q K^T over modes (no conjugation) ------
    #     one fused matmul: qk[..., :E] = Re, qk[..., E:] = Im
    k_rows = jnp.concatenate(
        [jnp.concatenate([k_r, -k_i], axis=-1),
         jnp.concatenate([k_i, k_r], axis=-1)], axis=-2)    # (G, 2E, 2M)
    qk = _bmm_nt(q_cat, k_rows)                             # (G, E, 2E) f32
    qk_r = qk[..., :E]
    qk_i = qk[..., E:]

    # --- 3) complex tanh: tanh(x+iy) = (sinh2x + i sin2y) / (cosh2x + cos2y) -
    xc = jnp.clip(qk_r, -20.0, 20.0)             # tanh fully saturated beyond
    e2p = jnp.exp(2.0 * xc)
    e2m = jnp.exp(-2.0 * xc)
    sinh2x = 0.5 * (e2p - e2m)
    cosh2x = 0.5 * (e2p + e2m)
    sin2y, cos2y = _sin_cos(2.0 * qk_i)
    den = cosh2x + cos2y
    t_r = sinh2x / den
    t_i = sin2y / den

    # --- 4) per-(batch, head) complex (tanh QK) @ K over channels ------------
    #     one fused matmul with a block RHS: v = [v_r | v_i]
    t_cat = jnp.concatenate([t_r.astype(jnp.bfloat16),
                             t_i.astype(jnp.bfloat16)], axis=-1)  # (G, E, 2E)
    k_blk = jnp.concatenate(
        [jnp.concatenate([k_r, k_i], axis=-1),
         jnp.concatenate([-k_i, k_r], axis=-1)], axis=-2)   # (G, 2E, 2M)
    v_cat = _bmm_nn(t_cat, k_blk)                           # (G, E, 2M) f32
    v_cat = v_cat.astype(jnp.bfloat16).reshape(Bb, N, M2)

    # --- 5) swap batch <-> (head, channel) -----------------------------------
    #     the per-(h, e) weight matmul wants the Bb batch rows as its LHS rows.
    for b in range(Bb):                                     # static, small
        vt_ref[:, b, :] = v_cat[b]

    # --- 6) per-(head, channel) complex mode-mixing weights ------------------
    #     batched over N = Hb*E, Bb LHS rows each (amortizes MXU weight
    #     staging instead of thousands of 1-row matvecs).
    osc_ref[...] = _bmm_nn(vt_ref[...], wb_ref[...])        # (N, Bb, 2M) f32

    # --- 7) inverse DFT (bin scatter + irfft fused, 1/modes^2 folded in) -----
    ib = ib_ref[...]
    for b in range(Bb):
        o_b = osc_ref[:, b, :].astype(jnp.bfloat16)         # (N, 2M)
        out_ref[b, :, :] = _mm(o_b, ib)                     # (N, Lqp) f32


# -----------------------------------------------------------------------------
# Block-size selection: small Hb (just enough MXU rows), large Bb (weight-stage
# LHS rows / step-overhead amortization), bounded by a conservative VMEM budget
# that also fits v5e's 16 MiB / v7x's 64 MiB scoped-VMEM regimes.
# -----------------------------------------------------------------------------
def _choose_blocks(B, H, E, M, Lqp, Lkp, budget=20 * 1024 * 1024):
    M2 = 2 * M

    def hb_ok(hb):
        # (8,128) rule: the H*E block dim must be sublane friendly or full.
        return hb == H or (hb * E) % 16 == 0

    def step_bytes(hb, bb):
        n = hb * E
        return (2 * n * M2 * M2 * 2                        # weight block (x2 buf)
                + 2 * bb * n * (Lqp + Lkp) * 2             # q / k blocks (bf16)
                + 2 * bb * n * Lqp * 4                     # output block (f32)
                + 2 * ((Lqp + Lkp) * M2 + M2 * Lqp) * 2    # DFT / iDFT bases
                + bb * n * M2 * 6                          # swap scratches
                + 6 * bb * n * M2 * 4)                     # live f32 temporaries

    valid = [d for d in range(1, H + 1) if H % d == 0 and hb_ok(d)]
    hb = next((d for d in valid if d * E >= 64), valid[-1])
    bb = 1
    for cand in range(1, B + 1):
        if B % cand or cand > 16:
            continue
        if step_bytes(hb, cand) <= budget:
            bb = cand
    # Keep >= 2 grid steps where possible so a 2-TensorCore part can still
    # split the ("parallel", "parallel") grid across cores.
    if H // hb == 1 and B // bb == 1 and B > 1:
        smaller = [d for d in range(1, bb) if B % d == 0]
        if smaller:
            bb = smaller[-1]
    return hb, bb, step_bytes(hb, bb)


# -----------------------------------------------------------------------------
# Wrapper.
# -----------------------------------------------------------------------------
def cross_grid_fourier_attention(q, k, w_real, w_imag, *, modes,
                                 mode_select_method='lowest'):
    B, Lq, H, E = q.shape
    Lkv = k.shape[1]
    index_q = get_frequency_modes(Lq, modes, mode_select_method)
    index_kv = get_frequency_modes(Lkv, modes, mode_select_method)
    # Like the torch module, the einsums require all mode counts == modes.
    assert len(index_q) == modes and len(index_kv) == modes
    assert w_real.shape == (H, modes, modes, E)
    M = modes
    M2 = 2 * M

    # Pad the sequence axis to a lane multiple so loads and the output store
    # are lane-dense; the DFT basis is zero on the padded rows and the extra
    # output columns are sliced off below.
    Lqp = _round_up(Lq, 128)
    Lkp = _round_up(Lkv, 128)

    Hb, Bb, vmem_est = _choose_blocks(B, H, E, M, Lqp, Lkp)

    # (B, L, H, E) -> (B, H*E, Lpad): sequence last (lanes), (H, E) flattened.
    xq = jnp.transpose(q, (0, 2, 3, 1)).reshape(B, H * E, Lq)
    xk = jnp.transpose(k, (0, 2, 3, 1)).reshape(B, H * E, Lkv)
    xq = jnp.pad(xq, ((0, 0), (0, 0), (0, Lqp - Lq))).astype(jnp.bfloat16)
    xk = jnp.pad(xk, ((0, 0), (0, 0), (0, Lkp - Lkv))).astype(jnp.bfloat16)

    fq = _dft_basis(Lq, Lqp, index_q)                       # (Lqp, 2M) bf16
    fk = _dft_basis(Lkv, Lkp, index_kv)                     # (Lkp, 2M) bf16
    ib = _idft_basis(Lq, Lqp, index_q,
                     1.0 / float(modes * modes))            # (2M, Lqp) bf16
    wb = _complex_weight_block(w_real, w_imag)              # (H*E, 2M, 2M) bf16

    kern = functools.partial(_fourier_cross_attn_kernel, heads=Hb, channels=E)

    # Only raise the scoped-VMEM limit when the chosen tiling actually needs
    # it (keeps the small-shape path on compiler defaults).
    vmem_limit = 48 * 1024 * 1024 if vmem_est > 14 * 1024 * 1024 else None

    out = pl.pallas_call(
        kern,
        out_shape=jax.ShapeDtypeStruct((B, H * E, Lqp), jnp.float32),
        # Batch innermost: the weight block's index is constant across the
        # inner loop, so it stays VMEM resident (H/Hb fetches, not the grid
        # size), while Bb amortizes per-step overhead.
        grid=(H // Hb, B // Bb),
        in_specs=[
            pl.BlockSpec((Bb, Hb * E, Lqp), lambda h, b: (b, h, 0)),
            pl.BlockSpec((Bb, Hb * E, Lkp), lambda h, b: (b, h, 0)),
            pl.BlockSpec((Lqp, M2), lambda h, b: (0, 0)),
            pl.BlockSpec((Lkp, M2), lambda h, b: (0, 0)),
            pl.BlockSpec((Hb * E, M2, M2), lambda h, b: (h, 0, 0)),
            pl.BlockSpec((M2, Lqp), lambda h, b: (0, 0)),
        ],
        out_specs=pl.BlockSpec((Bb, Hb * E, Lqp), lambda h, b: (b, h, 0)),
        scratch_shapes=[
            pltpu.VMEM((Hb * E, Bb, M2), jnp.bfloat16),     # batch<->(h,e) swap
            pltpu.VMEM((Hb * E, Bb, M2), jnp.float32),      # weight-stage out
        ],
        compiler_params=pltpu.CompilerParams(
            dimension_semantics=("parallel", "parallel"),
            vmem_limit_bytes=vmem_limit),
    )(xq, xk, fq, fk, wb, ib)

    out = out[:, :, :Lq].reshape(B, H, E, Lq)
    return out   # (B, H, E, Lq), same as the torch module's return


# -----------------------------------------------------------------------------
# Pure NumPy (float64, FFT-based) reference of the torch forward pass.
# -----------------------------------------------------------------------------
def reference_forward(q, k, w_real, w_imag, modes, mode_select_method='lowest'):
    q = np.asarray(q, dtype=np.float64)
    k = np.asarray(k, dtype=np.float64)
    W = np.asarray(w_real, np.float64) + 1j * np.asarray(w_imag, np.float64)
    B, Lq, H, E = q.shape
    Lkv = k.shape[1]
    index_q = get_frequency_modes(Lq, modes, mode_select_method)
    index_kv = get_frequency_modes(Lkv, modes, mode_select_method)
    xq = np.transpose(q, (0, 2, 3, 1))
    xk = np.transpose(k, (0, 2, 3, 1))
    xq_ft = np.fft.rfft(xq, axis=-1)[..., index_q]
    xk_ft = np.fft.rfft(xk, axis=-1)[..., index_kv]
    xqk = np.einsum('bhxe,bhye->bhxy', xq_ft, xk_ft)
    xqk = np.tanh(xqk)
    xqkv = np.einsum('bhxy,bhye->bhxe', xqk, xk_ft)
    xqkvw = np.einsum('bhxe,heox->bhxo', xqkv, W)
    out_ft = np.zeros((B, H, E, Lq // 2 + 1), dtype=np.complex128)
    out_ft[..., index_q] = xqkvw
    # irfft ignores the imaginary part of DC / Nyquist; make it explicit.
    out_ft[..., 0] = out_ft[..., 0].real
    out_ft[..., -1] = out_ft[..., -1].real
    return np.fft.irfft(out_ft / modes / modes, n=Lq, axis=-1)


# -----------------------------------------------------------------------------
if __name__ == "__main__":
    B, Lq, Lkv, H, E, modes = 2, 16, 16, 4, 4, 4   # head_num=4, in_channels=4

    key = jax.random.PRNGKey(0)
    kq, kk, kwr, kwi = jax.random.split(key, 4)
    q = 0.3 * jax.random.normal(kq, (B, Lq, H, E), dtype=jnp.float32)
    k = 0.3 * jax.random.normal(kk, (B, Lkv, H, E), dtype=jnp.float32)

    # weights1 = scale * rand(head_num, modes, modes, in_channels), complex
    scale = 1.0 / (modes * modes)
    w_real = scale * jax.random.uniform(kwr, (H, modes, modes, E), dtype=jnp.float32)
    w_imag = scale * jax.random.uniform(kwi, (H, modes, modes, E), dtype=jnp.float32)

    out = cross_grid_fourier_attention(q, k, w_real, w_imag, modes=modes)
    out = jax.block_until_ready(out)
    assert out.shape == (B, H, E, Lq)

    ref = reference_forward(q, k, w_real, w_imag, modes)
    out64 = np.asarray(out, np.float64)
    peak = max(float(np.max(np.abs(ref))), 1e-12)
    # bf16-input / f32-accumulate matmuls: validate against float64 reference
    # with a tolerance scaled to the output magnitude.
    np.testing.assert_allclose(out64, ref, rtol=5e-2, atol=5e-2 * peak)
    print("KERNEL_OK")
</pallas_src>

<mosaic_0001>
module attributes {stable_mosaic.version = 11 : i64} {
  func.func @_fourier_cross_attn_kernel(%arg0: i32, %arg1: i32, %arg2: memref<1x16x128xbf16, #tpu.memory_space<vmem>>, %arg3: memref<1x16x128xbf16, #tpu.memory_space<vmem>>, %arg4: memref<128x8xbf16, #tpu.memory_space<vmem>>, %arg5: memref<128x8xbf16, #tpu.memory_space<vmem>>, %arg6: memref<16x8x8xbf16, #tpu.memory_space<vmem>>, %arg7: memref<8x128xbf16, #tpu.memory_space<vmem>>, %arg8: memref<1x16x128xf32, #tpu.memory_space<vmem>>, %arg9: memref<16x1x8xbf16, #tpu.memory_space<vmem>>, %arg10: memref<16x1x8xf32, #tpu.memory_space<vmem>>) attributes {dimension_semantics = [#tpu.dimension_semantics<parallel>, #tpu.dimension_semantics<parallel>], iteration_bounds = array<i64: 1, 2>, scalar_prefetch = 0 : i64, scratch_operands = 2 : i64, tpu.core_type = #tpu.core_type<tc>, window_params = [{transform_indices = @transform_0, window_bounds = array<i64: 1, 16, 128>}, {transform_indices = @transform_1, window_bounds = array<i64: 1, 16, 128>}, {pipeline_mode = #tpu.pipeline_mode<synchronous>, transform_indices = @transform_2, window_bounds = array<i64: 128, 8>}, {pipeline_mode = #tpu.pipeline_mode<synchronous>, transform_indices = @transform_3, window_bounds = array<i64: 128, 8>}, {transform_indices = @transform_4, window_bounds = array<i64: 16, 8, 8>}, {pipeline_mode = #tpu.pipeline_mode<synchronous>, transform_indices = @transform_5, window_bounds = array<i64: 8, 128>}, {transform_indices = @transform_6, window_bounds = array<i64: 1, 16, 128>}]} {
    %c0 = arith.constant 0 : index
    %c0_0 = arith.constant 0 : index
    %c0_1 = arith.constant 0 : index
    %0 = vector.load %arg2[%c0, %c0_0, %c0_1] : memref<1x16x128xbf16, #tpu.memory_space<vmem>>, vector<1x16x128xbf16>
    %1 = vector.shape_cast %0 : vector<1x16x128xbf16> to vector<16x128xbf16>
    %c0_2 = arith.constant 0 : index
    %c0_3 = arith.constant 0 : index
    %c0_4 = arith.constant 0 : index
    %2 = vector.load %arg3[%c0_2, %c0_3, %c0_4] : memref<1x16x128xbf16, #tpu.memory_space<vmem>>, vector<1x16x128xbf16>
    %3 = vector.shape_cast %2 : vector<1x16x128xbf16> to vector<16x128xbf16>
    %c0_5 = arith.constant 0 : index
    %c0_6 = arith.constant 0 : index
    %4 = vector.load %arg4[%c0_5, %c0_6] : memref<128x8xbf16, #tpu.memory_space<vmem>>, vector<128x8xbf16>
    %cst = arith.constant dense<0.000000e+00> : vector<16x8xf32>
    %5 = tpu.matmul %1, %4, %cst {dimension_numbers = #tpu.dot_dimension_numbers<[1], [0], [0], [1], [0, 0, 1, 1], [], []>} : vector<16x128xbf16>, vector<128x8xbf16>, vector<16x8xf32> -> vector<16x8xf32>
    %6 = vector.shape_cast %5 : vector<16x8xf32> to vector<4x4x8xf32>
    %c0_7 = arith.constant 0 : index
    %c0_8 = arith.constant 0 : index
    %7 = vector.load %arg5[%c0_7, %c0_8] : memref<128x8xbf16, #tpu.memory_space<vmem>>, vector<128x8xbf16>
    %cst_9 = arith.constant dense<0.000000e+00> : vector<16x8xf32>
    %8 = tpu.matmul %3, %7, %cst_9 {dimension_numbers = #tpu.dot_dimension_numbers<[1], [0], [0], [1], [0, 0, 1, 1], [], []>} : vector<16x128xbf16>, vector<128x8xbf16>, vector<16x8xf32> -> vector<16x8xf32>
    %9 = vector.shape_cast %8 : vector<16x8xf32> to vector<4x4x8xf32>
    %10 = arith.truncf %6 : vector<4x4x8xf32> to vector<4x4x8xbf16>
    %11 = arith.truncf %9 : vector<4x4x8xf32> to vector<4x4x8xbf16>
    %12 = vector.extract_strided_slice %11 {offsets = [0, 0, 0], sizes = [4, 4, 4], strides = [1, 1, 1]} : vector<4x4x8xbf16> to vector<4x4x4xbf16>
    %13 = vector.extract_strided_slice %11 {offsets = [0, 0, 4], sizes = [4, 4, 4], strides = [1, 1, 1]} : vector<4x4x8xbf16> to vector<4x4x4xbf16>
    %cst_10 = arith.constant 0.000000e+00 : bf16
    %14 = vector.broadcast %cst_10 : bf16 to vector<4x4x4xbf16>
    %15 = arith.subf %14, %13 : vector<4x4x4xbf16>
    %16 = tpu.concatenate %12, %15 in 2 : vector<4x4x4xbf16>, vector<4x4x4xbf16> -> vector<4x4x8xbf16>
    %17 = tpu.concatenate %13, %12 in 2 : vector<4x4x4xbf16>, vector<4x4x4xbf16> -> vector<4x4x8xbf16>
    %18 = tpu.concatenate %16, %17 in 1 : vector<4x4x8xbf16>, vector<4x4x8xbf16> -> vector<4x8x8xbf16>
    %cst_11 = arith.constant dense<0.000000e+00> : vector<4x4x8xf32>
    %19 = tpu.matmul %10, %18, %cst_11 {dimension_numbers = #tpu.dot_dimension_numbers<[2], [2], [1], [1], [0, 0, 0, 1, 1, 1], [0], [0]>} : vector<4x4x8xbf16>, vector<4x8x8xbf16>, vector<4x4x8xf32> -> vector<4x4x8xf32>
    %20 = vector.extract_strided_slice %19 {offsets = [0, 0, 0], sizes = [4, 4, 4], strides = [1, 1, 1]} : vector<4x4x8xf32> to vector<4x4x4xf32>
    %21 = vector.extract_strided_slice %19 {offsets = [0, 0, 4], sizes = [4, 4, 4], strides = [1, 1, 1]} : vector<4x4x8xf32> to vector<4x4x4xf32>
    %cst_12 = arith.constant -2.000000e+01 : f32
    %cst_13 = arith.constant 2.000000e+01 : f32
    %22 = vector.broadcast %cst_12 : f32 to vector<4x4x4xf32>
    %23 = arith.maximumf %22, %20 : vector<4x4x4xf32>
    %24 = vector.broadcast %cst_13 : f32 to vector<4x4x4xf32>
    %25 = arith.minimumf %24, %23 : vector<4x4x4xf32>
    %cst_14 = arith.constant 2.000000e+00 : f32
    %26 = vector.broadcast %cst_14 : f32 to vector<4x4x4xf32>
    %27 = arith.mulf %26, %25 : vector<4x4x4xf32>
    %28 = math.exp %27 : vector<4x4x4xf32>
    %cst_15 = arith.constant -2.000000e+00 : f32
    %29 = vector.broadcast %cst_15 : f32 to vector<4x4x4xf32>
    %30 = arith.mulf %29, %25 : vector<4x4x4xf32>
    %31 = math.exp %30 : vector<4x4x4xf32>
    %32 = arith.subf %28, %31 : vector<4x4x4xf32>
    %cst_16 = arith.constant 5.000000e-01 : f32
    %33 = vector.broadcast %cst_16 : f32 to vector<4x4x4xf32>
    %34 = arith.mulf %33, %32 : vector<4x4x4xf32>
    %35 = arith.addf %28, %31 : vector<4x4x4xf32>
    %cst_17 = arith.constant 5.000000e-01 : f32
    %36 = vector.broadcast %cst_17 : f32 to vector<4x4x4xf32>
    %37 = arith.mulf %36, %35 : vector<4x4x4xf32>
    %cst_18 = arith.constant 2.000000e+00 : f32
    %38 = vector.broadcast %cst_18 : f32 to vector<4x4x4xf32>
    %39 = arith.mulf %38, %21 : vector<4x4x4xf32>
    %cst_19 = arith.constant 0.159154937 : f32
    %40 = vector.broadcast %cst_19 : f32 to vector<4x4x4xf32>
    %41 = arith.mulf %39, %40 : vector<4x4x4xf32>
    %cst_20 = arith.constant 5.000000e-01 : f32
    %42 = vector.broadcast %cst_20 : f32 to vector<4x4x4xf32>
    %43 = arith.addf %41, %42 : vector<4x4x4xf32>
    %44 = math.floor %43 : vector<4x4x4xf32>
    %cst_21 = arith.constant 6.281250e+00 : f32
    %45 = vector.broadcast %cst_21 : f32 to vector<4x4x4xf32>
    %46 = arith.mulf %44, %45 : vector<4x4x4xf32>
    %47 = arith.subf %39, %46 : vector<4x4x4xf32>
    %cst_22 = arith.constant 0.00193530717 : f32
    %48 = vector.broadcast %cst_22 : f32 to vector<4x4x4xf32>
    %49 = arith.mulf %44, %48 : vector<4x4x4xf32>
    %50 = arith.subf %47, %49 : vector<4x4x4xf32>
    %51 = arith.mulf %50, %50 : vector<4x4x4xf32>
    %cst_23 = arith.constant -7.6471636E-13 : f32
    %52 = vector.broadcast %cst_23 : f32 to vector<4x4x4xf32>
    %53 = arith.mulf %51, %52 : vector<4x4x4xf32>
    %cst_24 = arith.constant 1.60590444E-10 : f32
    %54 = vector.broadcast %cst_24 : f32 to vector<4x4x4xf32>
    %55 = arith.addf %54, %53 : vector<4x4x4xf32>
    %56 = arith.mulf %51, %55 : vector<4x4x4xf32>
    %cst_25 = arith.constant -2.50521079E-8 : f32
    %57 = vector.broadcast %cst_25 : f32 to vector<4x4x4xf32>
    %58 = arith.addf %57, %56 : vector<4x4x4xf32>
    %59 = arith.mulf %51, %58 : vector<4x4x4xf32>
    %cst_26 = arith.constant 2.75573188E-6 : f32
    %60 = vector.broadcast %cst_26 : f32 to vector<4x4x4xf32>
    %61 = arith.addf %60, %59 : vector<4x4x4xf32>
    %62 = arith.mulf %51, %61 : vector<4x4x4xf32>
    %cst_27 = arith.constant -1.98412701E-4 : f32
    %63 = vector.broadcast %cst_27 : f32 to vector<4x4x4xf32>
    %64 = arith.addf %63, %62 : vector<4x4x4xf32>
    %65 = arith.mulf %51, %64 : vector<4x4x4xf32>
    %cst_28 = arith.constant 0.00833333377 : f32
    %66 = vector.broadcast %cst_28 : f32 to vector<4x4x4xf32>
    %67 = arith.addf %66, %65 : vector<4x4x4xf32>
    %68 = arith.mulf %51, %67 : vector<4x4x4xf32>
    %cst_29 = arith.constant -0.166666672 : f32
    %69 = vector.broadcast %cst_29 : f32 to vector<4x4x4xf32>
    %70 = arith.addf %69, %68 : vector<4x4x4xf32>
    %71 = arith.mulf %51, %70 : vector<4x4x4xf32>
    %cst_30 = arith.constant 1.000000e+00 : f32
    %72 = vector.broadcast %cst_30 : f32 to vector<4x4x4xf32>
    %73 = arith.addf %72, %71 : vector<4x4x4xf32>
    %74 = arith.mulf %50, %73 : vector<4x4x4xf32>
    %cst_31 = arith.constant -1.14707454E-11 : f32
    %75 = vector.broadcast %cst_31 : f32 to vector<4x4x4xf32>
    %76 = arith.mulf %51, %75 : vector<4x4x4xf32>
    %cst_32 = arith.constant 2.08767559E-9 : f32
    %77 = vector.broadcast %cst_32 : f32 to vector<4x4x4xf32>
    %78 = arith.addf %77, %76 : vector<4x4x4xf32>
    %79 = arith.mulf %51, %78 : vector<4x4x4xf32>
    %cst_33 = arith.constant -2.755732E-7 : f32
    %80 = vector.broadcast %cst_33 : f32 to vector<4x4x4xf32>
    %81 = arith.addf %80, %79 : vector<4x4x4xf32>
    %82 = arith.mulf %51, %81 : vector<4x4x4xf32>
    %cst_34 = arith.constant 2.48015876E-5 : f32
    %83 = vector.broadcast %cst_34 : f32 to vector<4x4x4xf32>
    %84 = arith.addf %83, %82 : vector<4x4x4xf32>
    %85 = arith.mulf %51, %84 : vector<4x4x4xf32>
    %cst_35 = arith.constant -0.00138888892 : f32
    %86 = vector.broadcast %cst_35 : f32 to vector<4x4x4xf32>
    %87 = arith.addf %86, %85 : vector<4x4x4xf32>
    %88 = arith.mulf %51, %87 : vector<4x4x4xf32>
    %cst_36 = arith.constant 0.0416666679 : f32
    %89 = vector.broadcast %cst_36 : f32 to vector<4x4x4xf32>
    %90 = arith.addf %89, %88 : vector<4x4x4xf32>
    %91 = arith.mulf %51, %90 : vector<4x4x4xf32>
    %cst_37 = arith.constant -5.000000e-01 : f32
    %92 = vector.broadcast %cst_37 : f32 to vector<4x4x4xf32>
    %93 = arith.addf %92, %91 : vector<4x4x4xf32>
    %94 = arith.mulf %51, %93 : vector<4x4x4xf32>
    %cst_38 = arith.constant 1.000000e+00 : f32
    %95 = vector.broadcast %cst_38 : f32 to vector<4x4x4xf32>
    %96 = arith.addf %95, %94 : vector<4x4x4xf32>
    %97 = arith.addf %37, %96 : vector<4x4x4xf32>
    %98 = arith.divf %34, %97 : vector<4x4x4xf32>
    %99 = arith.divf %74, %97 : vector<4x4x4xf32>
    %100 = arith.truncf %98 : vector<4x4x4xf32> to vector<4x4x4xbf16>
    %101 = arith.truncf %99 : vector<4x4x4xf32> to vector<4x4x4xbf16>
    %102 = tpu.concatenate %100, %101 in 2 : vector<4x4x4xbf16>, vector<4x4x4xbf16> -> vector<4x4x8xbf16>
    %103 = tpu.concatenate %12, %13 in 2 : vector<4x4x4xbf16>, vector<4x4x4xbf16> -> vector<4x4x8xbf16>
    %cst_39 = arith.constant 0.000000e+00 : bf16
    %104 = vector.broadcast %cst_39 : bf16 to vector<4x4x4xbf16>
    %105 = arith.subf %104, %13 : vector<4x4x4xbf16>
    %106 = tpu.concatenate %105, %12 in 2 : vector<4x4x4xbf16>, vector<4x4x4xbf16> -> vector<4x4x8xbf16>
    %107 = tpu.concatenate %103, %106 in 1 : vector<4x4x8xbf16>, vector<4x4x8xbf16> -> vector<4x8x8xbf16>
    %cst_40 = arith.constant dense<0.000000e+00> : vector<4x4x8xf32>
    %108 = tpu.matmul %102, %107, %cst_40 {dimension_numbers = #tpu.dot_dimension_numbers<[2], [1], [1], [2], [0, 0, 0, 1, 1, 2], [0], [0]>} : vector<4x4x8xbf16>, vector<4x8x8xbf16>, vector<4x4x8xf32> -> vector<4x4x8xf32>
    %109 = arith.truncf %108 : vector<4x4x8xf32> to vector<4x4x8xbf16>
    %110 = vector.shape_cast %109 : vector<4x4x8xbf16> to vector<1x16x8xbf16>
    %111 = vector.shape_cast %110 : vector<1x16x8xbf16> to vector<16x8xbf16>
    %c0_41 = arith.constant 0 : index
    %c0_42 = arith.constant 0 : index
    %c0_43 = arith.constant 0 : index
    %112 = vector.load %arg9[%c0_41, %c0_42, %c0_43] : memref<16x1x8xbf16, #tpu.memory_space<vmem>>, vector<16x1x8xbf16>
    %113 = vector.shape_cast %112 : vector<16x1x8xbf16> to vector<16x8xbf16>
    %114 = vector.shape_cast %111 : vector<16x8xbf16> to vector<16x1x8xbf16>
    tpu.vector_store %arg9[%c0_41, %c0_42, %c0_43], %114 {strides = array<i32>} : memref<16x1x8xbf16, #tpu.memory_space<vmem>>, vector<16x1x8xbf16>,
    %c0_44 = arith.constant 0 : index
    %c0_45 = arith.constant 0 : index
    %c0_46 = arith.constant 0 : index
    %115 = vector.load %arg9[%c0_44, %c0_45, %c0_46] : memref<16x1x8xbf16, #tpu.memory_space<vmem>>, vector<16x1x8xbf16>
    %c0_47 = arith.constant 0 : index
    %c0_48 = arith.constant 0 : index
    %c0_49 = arith.constant 0 : index
    %116 = vector.load %arg6[%c0_47, %c0_48, %c0_49] : memref<16x8x8xbf16, #tpu.memory_space<vmem>>, vector<16x8x8xbf16>
    %cst_50 = arith.constant dense<0.000000e+00> : vector<16x1x8xf32>
    %117 = tpu.matmul %115, %116, %cst_50 {dimension_numbers = #tpu.dot_dimension_numbers<[2], [1], [1], [2], [0, 0, 0, 1, 1, 2], [0], [0]>} : vector<16x1x8xbf16>, vector<16x8x8xbf16>, vector<16x1x8xf32> -> vector<16x1x8xf32>
    %c0_51 = arith.constant 0 : index
    %c0_52 = arith.constant 0 : index
    %c0_53 = arith.constant 0 : index
    %118 = vector.load %arg10[%c0_51, %c0_52, %c0_53] : memref<16x1x8xf32, #tpu.memory_space<vmem>>, vector<16x1x8xf32>
    tpu.vector_store %arg10[%c0_51, %c0_52, %c0_53], %117 {strides = array<i32>} : memref<16x1x8xf32, #tpu.memory_space<vmem>>, vector<16x1x8xf32>,
    %c0_54 = arith.constant 0 : index
    %c0_55 = arith.constant 0 : index
    %119 = vector.load %arg7[%c0_54, %c0_55] : memref<8x128xbf16, #tpu.memory_space<vmem>>, vector<8x128xbf16>
    %c0_56 = arith.constant 0 : index
    %c0_57 = arith.constant 0 : index
    %c0_58 = arith.constant 0 : index
    %120 = vector.load %arg10[%c0_56, %c0_57, %c0_58] : memref<16x1x8xf32, #tpu.memory_space<vmem>>, vector<16x1x8xf32>
    %121 = vector.shape_cast %120 : vector<16x1x8xf32> to vector<16x8xf32>
    %122 = arith.truncf %121 : vector<16x8xf32> to vector<16x8xbf16>
    %cst_59 = arith.constant dense<0.000000e+00> : vector<16x128xf32>
    %123 = tpu.matmul %122, %119, %cst_59 {dimension_numbers = #tpu.dot_dimension_numbers<[1], [0], [0], [1], [0, 0, 1, 1], [], []>} : vector<16x8xbf16>, vector<8x128xbf16>, vector<16x128xf32> -> vector<16x128xf32>
    %c0_60 = arith.constant 0 : index
    %c0_61 = arith.constant 0 : index
    %c0_62 = arith.constant 0 : index
    %124 = vector.load %arg8[%c0_60, %c0_61, %c0_62] : memref<1x16x128xf32, #tpu.memory_space<vmem>>, vector<1x16x128xf32>
    %125 = vector.shape_cast %124 : vector<1x16x128xf32> to vector<16x128xf32>
    %126 = vector.shape_cast %123 : vector<16x128xf32> to vector<1x16x128xf32>
    tpu.vector_store %arg8[%c0_60, %c0_61, %c0_62], %126 {strides = array<i32>} : memref<1x16x128xf32, #tpu.memory_space<vmem>>, vector<1x16x128xf32>,
    return
  }
  func.func @transform_0(%arg0: i32, %arg1: i32) -> (i32, i32, i32) {
    %c0_i32 = arith.constant 0 : i32
    %c0_i32_0 = arith.constant 0 : i32
    return %arg1, %arg0, %c0_i32 : i32, i32, i32
  }
  func.func @transform_1(%arg0: i32, %arg1: i32) -> (i32, i32, i32) {
    %c0_i32 = arith.constant 0 : i32
    %c0_i32_0 = arith.constant 0 : i32
    return %arg1, %arg0, %c0_i32 : i32, i32, i32
  }
  func.func @transform_2(%arg0: i32, %arg1: i32) -> (i32, i32) {
    %c0_i32 = arith.constant 0 : i32
    %c0_i32_0 = arith.constant 0 : i32
    %c0_i32_1 = arith.constant 0 : i32
    return %c0_i32, %c0_i32_0 : i32, i32
  }
  func.func @transform_3(%arg0: i32, %arg1: i32) -> (i32, i32) {
    %c0_i32 = arith.constant 0 : i32
    %c0_i32_0 = arith.constant 0 : i32
    %c0_i32_1 = arith.constant 0 : i32
    return %c0_i32, %c0_i32_0 : i32, i32
  }
  func.func @transform_4(%arg0: i32, %arg1: i32) -> (i32, i32, i32) {
    %c0_i32 = arith.constant 0 : i32
    %c0_i32_0 = arith.constant 0 : i32
    %c0_i32_1 = arith.constant 0 : i32
    return %arg0, %c0_i32, %c0_i32_0 : i32, i32, i32
  }
  func.func @transform_5(%arg0: i32, %arg1: i32) -> (i32, i32) {
    %c0_i32 = arith.constant 0 : i32
    %c0_i32_0 = arith.constant 0 : i32
    %c0_i32_1 = arith.constant 0 : i32
    return %c0_i32, %c0_i32_0 : i32, i32
  }
  func.func @transform_6(%arg0: i32, %arg1: i32) -> (i32, i32, i32) {
    %c0_i32 = arith.constant 0 : i32
    %c0_i32_0 = arith.constant 0 : i32
    return %arg1, %arg0, %c0_i32 : i32, i32, i32
  }
}

</mosaic_0001>

<llo_original>
// kernel: tpu_custom_call.1
$region0: #{tpu_custom_call.1}
  #allocation0 [shape = 'u32[]', space=smem, size = 0x4, offset = 0x4, fixed_abs, tag = 'smem constant byte address 0x4 - core index']
  #allocation1 [shape = 'u32[144,128]{1,0:T(1,128)}', space=vmem, size = 0x12000, scoped, tag = 'internal scratch']
  #allocation2 [shape = 'bf16[16,1,8]{2,1,0:T(2,128)(2,1)}', space=vmem, size = 0x2000, scoped, tag = 'scratch operand']
  #allocation3 [shape = 'f32[16,1,8]{2,1,0:T(1,128)}', space=vmem, size = 0x2000, scoped, tag = 'scratch operand']
  %s0 = inlined_call_operand.vmem [shape: bf16[2,16,128], index: 0, kind: input, shape index: {}]
  %s1 = inlined_call_operand.vmem [shape: bf16[2,16,128], index: 1, kind: input, shape index: {}]
  %s2 = inlined_call_operand.vmem [shape: bf16[128,8], index: 2, kind: input, shape index: {}]
  %s3 = inlined_call_operand.vmem [shape: bf16[128,8], index: 3, kind: input, shape index: {}]
  %s4 = inlined_call_operand.vmem [shape: bf16[16,8,8], index: 4, kind: input, shape index: {}]
  %s5 = inlined_call_operand.vmem [shape: bf16[8,128], index: 5, kind: input, shape index: {}]
  %s6 = inlined_call_operand.hbm [shape: f32[2,16,128], index: 6, kind: output, shape index: {}]
  %s7 = sld [smem:[#allocation0]]
  $region57: #{tpu_custom_call.1} parent=0
    _
  %s9 = ssub.s32 1, %s7
  %s10 = scalar_select 0, %s9, %s7
  $region1: #{tpu_custom_call.1} parent=0
    #allocation4 [shape = 'u8[16384]{0}', space=vmem, size = 0x4000, scoped, tag = 'output window, operand 0']
    #allocation5 [shape = 's32[2]{0}', space=sflag, size = 0x8, scoped, tag = 'scoped memory for tpu_custom_call.1']
    %11 = vsyncpa [#allocation5], 0
    %s12 = scalar_lea.sflag [#allocation5], 1
    %13 = vsyncpa %s12, 0
    loop: start=0, step=1, limit=4
    $region2: #{tpu_custom_call.1} parent=1 // loop_pre_header
      _
    $region3: #{tpu_custom_call.1} parent=1 // loop_header
      %s15 = sphi 0, %s19
      %p16 = scmp.ge.s32.totalorder %s15, 4
      %s22 = sphi 0, %s34
      %s23 = sphi 0, %s30
      %s24 = sphi 0, %s22
      %s25 = sphi 0, %s23
      %s26 = sphi 0, %s24
      %s27 = sphi 0, %s25
      %s39 = sphi 0, %s41
      %s42 = sphi 0, %s39
      %s43 = sphi 0, %s42
      %s59 = sphi 0, %s43
      %s67 = sphi 0, %s69
      %s70 = sphi 0, %s67
      %s71 = sphi 0, %s70
      %s87 = sphi 0, %s71
      %s91 = sphi 0, %s91
      %s93 = sphi 0, %s91
      %s94 = sphi 0, %s93
      %s108 = sphi 0, %s94
      %s112 = sphi 0, %s112
      %s114 = sphi 0, %s112
      %s115 = sphi 0, %s114
      %s129 = sphi 0, %s115
      %s135 = sphi 0, %s137
      %s138 = sphi 0, %s135
      %s139 = sphi 0, %s138
      %s155 = sphi 0, %s139
      %s159 = sphi 0, %s159
      %s161 = sphi 0, %s159
      %s162 = sphi 0, %s161
      %s176 = sphi 0, %s162
      %s184 = sphi 0, %s186
      %s187 = sphi 0, %s184
      %s188 = sphi 0, %s187
      %s204 = sphi 0, %s188
    $region4: #{tpu_custom_call.1} parent=1 // loop_header_branch
      %18 = sbr.rel (%p16) target = $region8
    $region5: #{tpu_custom_call.1} parent=1 // loop_body
      %s20 = ssub.s32 %s15, 1
      %s21 = ssub.s32 %s15, 2
      %s28 = sadd.s32 1, %s23
      %p29 = scmp.ge.s32.totalorder %s28, 2
      %s30 = scalar_select %p29, 0, %s28
      %s31 = sadd.s32 1, %s22
      %s32 = scalar_select %p29, %s31, %s22
      %p33 = scmp.ge.s32.totalorder %s32, 1
      %s34 = scalar_select %p33, 0, %s32
      %s35 = ssub.s32 %s23, %s30
      %s36 = ssub.s32 %s22, %s34
      %s37 = sor.u32 %s35, %s36
      %p38 = scmp.eq.s32.totalorder %s37, 0
      %s40 = sadd.s32 %s39, 1
      %s41 = scalar_select %p38, %s39, %s40
      %p44 = pneg %p38
      %p45 = scmp.eq.s32.totalorder %s15, 1
      %p46 = por %p44, %p45
      %p47 = scmp.ne.s32.totalorder %s39, %s42
      %p48 = scmp.eq.s32.totalorder %s15, 0
      %p49 = por %p47, %p48
      %p50 = scmp.ne.s32.totalorder %s39, %s42
      %p51 = scmp.eq.s32.totalorder %s20, 1
      %p52 = por %p50, %p51
      %p53 = scmp.ne.s32.totalorder %s42, %s43
      %p54 = scmp.eq.s32.totalorder %s20, 0
      %p55 = por %p53, %p54
      %p56 = scmp.ne.s32.totalorder %s42, %s43
      %p57 = scmp.eq.s32.totalorder %s21, 1
      %p58 = por %p56, %p57
      %p60 = scmp.ne.s32.totalorder %s43, %s59
      %p61 = scmp.eq.s32.totalorder %s21, 0
      %p62 = por %p60, %p61
      %s63 = ssub.s32 %s23, %s30
      %s64 = ssub.s32 %s22, %s34
      %s65 = sor.u32 %s63, %s64
      %p66 = scmp.eq.s32.totalorder %s65, 0
      %s68 = sadd.s32 %s67, 1
      %s69 = scalar_select %p66, %s67, %s68
      %p72 = pneg %p66
      %p73 = scmp.eq.s32.totalorder %s15, 1
      %p74 = por %p72, %p73
      %p75 = scmp.ne.s32.totalorder %s67, %s70
      %p76 = scmp.eq.s32.totalorder %s15, 0
      %p77 = por %p75, %p76
      %p78 = scmp.ne.s32.totalorder %s67, %s70
      %p79 = scmp.eq.s32.totalorder %s20, 1
      %p80 = por %p78, %p79
      %p81 = scmp.ne.s32.totalorder %s70, %s71
      %p82 = scmp.eq.s32.totalorder %s20, 0
      %p83 = por %p81, %p82
      %p84 = scmp.ne.s32.totalorder %s70, %s71
      %p85 = scmp.eq.s32.totalorder %s21, 1
      %p86 = por %p84, %p85
      %p88 = scmp.ne.s32.totalorder %s71, %s87
      %p89 = scmp.eq.s32.totalorder %s21, 0
      %p90 = por %p88, %p89
      %s92 = sadd.s32 %s91, 1
      %p95 = scmp.eq.s32.totalorder %s15, 1
      %p96 = scmp.ne.s32.totalorder %s91, %s93
      %p97 = scmp.eq.s32.totalorder %s15, 0
      %p98 = por %p96, %p97
      %p99 = scmp.ne.s32.totalorder %s91, %s93
      %p100 = scmp.eq.s32.totalorder %s20, 1
      %p101 = por %p99, %p100
      %p102 = scmp.ne.s32.totalorder %s93, %s94
      %p103 = scmp.eq.s32.totalorder %s20, 0
      %p104 = por %p102, %p103
      %p105 = scmp.ne.s32.totalorder %s93, %s94
      %p106 = scmp.eq.s32.totalorder %s21, 1
      %p107 = por %p105, %p106
      %p109 = scmp.ne.s32.totalorder %s94, %s108
      %p110 = scmp.eq.s32.totalorder %s21, 0
      %p111 = por %p109, %p110
      %s113 = sadd.s32 %s112, 1
      %p116 = scmp.eq.s32.totalorder %s15, 1
      %p117 = scmp.ne.s32.totalorder %s112, %s114
      %p118 = scmp.eq.s32.totalorder %s15, 0
      %p119 = por %p117, %p118
      %p120 = scmp.ne.s32.totalorder %s112, %s114
      %p121 = scmp.eq.s32.totalorder %s20, 1
      %p122 = por %p120, %p121
      %p123 = scmp.ne.s32.totalorder %s114, %s115
      %p124 = scmp.eq.s32.totalorder %s20, 0
      %p125 = por %p123, %p124
      %p126 = scmp.ne.s32.totalorder %s114, %s115
      %p127 = scmp.eq.s32.totalorder %s21, 1
      %p128 = por %p126, %p127
      %p130 = scmp.ne.s32.totalorder %s115, %s129
      %p131 = scmp.eq.s32.totalorder %s21, 0
      %p132 = por %p130, %p131
      %s133 = ssub.s32 %s22, %s34
      %p134 = scmp.eq.s32.totalorder %s133, 0
      %s136 = sadd.s32 %s135, 1
      %s137 = scalar_select %p134, %s135, %s136
      %p140 = pneg %p134
      %p141 = scmp.eq.s32.totalorder %s15, 1
      %p142 = por %p140, %p141
      %p143 = scmp.ne.s32.totalorder %s135, %s138
      %p144 = scmp.eq.s32.totalorder %s15, 0
      %p145 = por %p143, %p144
      %p146 = scmp.ne.s32.totalorder %s135, %s138
      %p147 = scmp.eq.s32.totalorder %s20, 1
      %p148 = por %p146, %p147
      %p149 = scmp.ne.s32.totalorder %s138, %s139
      %p150 = scmp.eq.s32.totalorder %s20, 0
      %p151 = por %p149, %p150
      %p152 = scmp.ne.s32.totalorder %s138, %s139
      %p153 = scmp.eq.s32.totalorder %s21, 1
      %p154 = por %p152, %p153
      %p156 = scmp.ne.s32.totalorder %s139, %s155
      %p157 = scmp.eq.s32.totalorder %s21, 0
      %p158 = por %p156, %p157
      %s160 = sadd.s32 %s159, 1
      %p163 = scmp.eq.s32.totalorder %s15, 1
      %p164 = scmp.ne.s32.totalorder %s159, %s161
      %p165 = scmp.eq.s32.totalorder %s15, 0
      %p166 = por %p164, %p165
      %p167 = scmp.ne.s32.totalorder %s159, %s161
      %p168 = scmp.eq.s32.totalorder %s20, 1
      %p169 = por %p167, %p168
      %p170 = scmp.ne.s32.totalorder %s161, %s162
      %p171 = scmp.eq.s32.totalorder %s20, 0
      %p172 = por %p170, %p171
      %p173 = scmp.ne.s32.totalorder %s161, %s162
      %p174 = scmp.eq.s32.totalorder %s21, 1
      %p175 = por %p173, %p174
      %p177 = scmp.ne.s32.totalorder %s162, %s176
      %p178 = scmp.eq.s32.totalorder %s21, 0
      %p179 = por %p177, %p178
      %s180 = ssub.s32 %s23, %s30
      %s181 = ssub.s32 %s22, %s34
      %s182 = sor.u32 %s180, %s181
      %p183 = scmp.eq.s32.totalorder %s182, 0
      %s185 = sadd.s32 %s184, 1
      %s186 = scalar_select %p183, %s184, %s185
      %p189 = pneg %p183
      %p190 = scmp.eq.s32.totalorder %s15, 1
      %p191 = por %p189, %p190
      %p192 = scmp.ne.s32.totalorder %s184, %s187
      %p193 = scmp.eq.s32.totalorder %s15, 0
      %p194 = por %p192, %p193
      %p195 = scmp.ne.s32.totalorder %s184, %s187
      %p196 = scmp.eq.s32.totalorder %s20, 1
      %p197 = por %p195, %p196
      %p198 = scmp.ne.s32.totalorder %s187, %s188
      %p199 = scmp.eq.s32.totalorder %s20, 0
      %p200 = por %p198, %p199
      %p201 = scmp.ne.s32.totalorder %s187, %s188
      %p202 = scmp.eq.s32.totalorder %s21, 1
      %p203 = por %p201, %p202
      %p205 = scmp.ne.s32.totalorder %s188, %s204
      %p206 = scmp.eq.s32.totalorder %s21, 0
      %p207 = por %p205, %p206
      %p208 = scmp.le.s32.totalorder 1, %s15
      %p209 = scmp.lt.s32.totalorder %s15, 3
      %p210 = pnand %p208, %p209
      %p211 = pneg %p210
      // Predicated region
      $region9: #{tpu_custom_call.1} parent=5 // pred_check
        _
      $region10: #{tpu_custom_call.1} parent=5 // pred_check_branch
        %213 = sbr.rel (%p210) target = $region12
      $region11: #{tpu_custom_call.1} parent=5 // pred_region
        %s214 = ssub.s32 %s15, 1
        // Predicated region
        $region13: #{tpu_custom_call.1} parent=11 // pred_check
          %p215 = pneg %p104
        $region14: #{tpu_custom_call.1} parent=11 // pred_check_branch
          %217 = sbr.rel (%p215) target = $region16
        $region15: #{tpu_custom_call.1} parent=11 // pred_region
          _
        $region16: #{tpu_custom_call.1} parent=11 // pred_fallthru
          _
        // Predicated region
        $region17: #{tpu_custom_call.1} parent=11 // pred_check
          %p218 = pneg %p125
        $region18: #{tpu_custom_call.1} parent=11 // pred_check_branch
          %220 = sbr.rel (%p218) target = $region20
        $region19: #{tpu_custom_call.1} parent=11 // pred_region
          _
        $region20: #{tpu_custom_call.1} parent=11 // pred_fallthru
          _
        // Predicated region
        $region21: #{tpu_custom_call.1} parent=11 // pred_check
          %p221 = pneg %p151
        $region22: #{tpu_custom_call.1} parent=11 // pred_check_branch
          %223 = sbr.rel (%p221) target = $region24
        $region23: #{tpu_custom_call.1} parent=11 // pred_region
          %s224 = smul.u32 16, %s24
          %p225 = scmp.lt.s32.totalorder %s224, 15
          %s226 = scalar_select %p225, %s224, 15
          %s227 = smul.addr %s226, 4
          %s228 = scalar_lea.vmem %s4, %s227
          %s229 = smul.u32 16, %s24
        $region24: #{tpu_custom_call.1} parent=11 // pred_fallthru
          _
        // Predicated region
        $region25: #{tpu_custom_call.1} parent=11 // pred_check
          %p230 = pneg %p172
        $region26: #{tpu_custom_call.1} parent=11 // pred_check_branch
          %232 = sbr.rel (%p230) target = $region28
        $region27: #{tpu_custom_call.1} parent=11 // pred_region
          _
        $region28: #{tpu_custom_call.1} parent=11 // pred_fallthru
          _
      $region12: #{tpu_custom_call.1} parent=5 // pred_fallthru
        _
      %p233 = scmp.lt.s32.totalorder %s15, 2
      // Predicated region
      $region29: #{tpu_custom_call.1} parent=5 // pred_check
        %p234 = pneg %p233
      $region30: #{tpu_custom_call.1} parent=5 // pred_check_branch
        %236 = sbr.rel (%p234) target = $region32
      $region31: #{tpu_custom_call.1} parent=5 // pred_region
        // Predicated region
        $region33: #{tpu_custom_call.1} parent=31 // pred_check
          %p237 = pneg %p49
        $region34: #{tpu_custom_call.1} parent=31 // pred_check_branch
          %239 = sbr.rel (%p237) target = $region36
        $region35: #{tpu_custom_call.1} parent=31 // pred_region
          %s240 = smul.u32 2, %s22
          %p241 = scmp.lt.s32.totalorder %s23, 1
          %s242 = scalar_select %p241, %s23, 1
          %p243 = scmp.lt.s32.totalorder %s240, 1
          %s244 = scalar_select %p243, %s240, 1
          %s245 = smul.addr %s242, 2
          %s246 = sadd.s32 %s244, %s245
          %s247 = smul.addr %s246, 4
          %s248 = scalar_lea.vmem %s0, %s247
          %s249 = smul.u32 2, %s22
        $region36: #{tpu_custom_call.1} parent=31 // pred_fallthru
          _
        // Predicated region
        $region37: #{tpu_custom_call.1} parent=31 // pred_check
          %p250 = pneg %p77
        $region38: #{tpu_custom_call.1} parent=31 // pred_check_branch
          %252 = sbr.rel (%p250) target = $region40
        $region39: #{tpu_custom_call.1} parent=31 // pred_region
          %s253 = smul.u32 2, %s22
          %p254 = scmp.lt.s32.totalorder %s23, 1
          %s255 = scalar_select %p254, %s23, 1
          %p256 = scmp.lt.s32.totalorder %s253, 1
          %s257 = scalar_select %p256, %s253, 1
          %s258 = smul.addr %s255, 2
          %s259 = sadd.s32 %s257, %s258
          %s260 = smul.addr %s259, 4
          %s261 = scalar_lea.vmem %s1, %s260
          %s262 = smul.u32 2, %s22
        $region40: #{tpu_custom_call.1} parent=31 // pred_fallthru
          _
      $region32: #{tpu_custom_call.1} parent=5 // pred_fallthru
        _
      %p263 = scmp.le.s32.totalorder 1, %s15
      %p264 = scmp.lt.s32.totalorder %s15, 3
      %p265 = pnand %p263, %p264
      %p266 = pneg %p265
      // Predicated region
      $region41: #{tpu_custom_call.1} parent=5 // pred_check
        _
      $region42: #{tpu_custom_call.1} parent=5 // pred_check_branch
        %268 = sbr.rel (%p265) target = $region44
      $region43: #{tpu_custom_call.1} parent=5 // pred_region
        %s269 = ssub.s32 %s15, 1
        %s270 = smul.u32 2, %s24
        %p271 = scmp.lt.s32.totalorder %s25, 1
        %s272 = scalar_select %p271, %s25, 1
        %p273 = scmp.lt.s32.totalorder %s270, 1
        %s274 = scalar_select %p273, %s270, 1
        %s275 = smul.addr %s272, 2
        %s276 = sadd.s32 %s274, %s275
        %s277 = smul.addr %s276, 4
        %s278 = scalar_lea.vmem %s0, %s277
        %p279 = pneg %p55
        %p280 = pneg %p52
        %s281 = smul.u32 2, %s24
        %p282 = scmp.lt.s32.totalorder %s25, 1
        %s283 = scalar_select %p282, %s25, 1
        %p284 = scmp.lt.s32.totalorder %s281, 1
        %s285 = scalar_select %p284, %s281, 1
        %s286 = smul.addr %s283, 2
        %s287 = sadd.s32 %s285, %s286
        %s288 = smul.addr %s287, 4
        %s289 = scalar_lea.vmem %s1, %s288
        %p290 = pneg %p83
        %p291 = pneg %p80
        %p292 = pneg %p104
        %p293 = pneg %p101
        %p294 = pneg %p125
        %p295 = pneg %p122
        %s296 = smul.u32 16, %s24
        %p297 = scmp.lt.s32.totalorder %s296, 15
        %s298 = scalar_select %p297, %s296, 15
        %s299 = smul.addr %s298, 4
        %s300 = scalar_lea.vmem %s4, %s299
        %p301 = pneg %p151
        %p302 = pneg %p148
        %p303 = pneg %p172
        %p304 = pneg %p169
        %p305 = pneg %p200
        %p306 = pneg %p197
        %s307 = sand.u32 %s187, 1
        %s308 = scalar_lea.sflag [#allocation5], %s307
        %s309 = sand.u32 %s187, 1
        %s310 = smul.addr %s309, 16
        %s311 = scalar_lea.vmem [#allocation4], %s310
        %s312 = smul.u32 2, %s24
        %p313 = scmp.lt.s32.totalorder %s25, 1
        %s314 = scalar_select %p313, %s25, 1
        %p315 = scmp.lt.s32.totalorder %s312, 1
        %s316 = scalar_select %p315, %s312, 1
        %s317 = smul.addr %s314, 2
        %s318 = sadd.s32 %s316, %s317
        %s319 = smul.addr %s318, 4
        %s320 = scalar_lea.vmem %s0, %s319
        %s321 = smul.u32 2, %s24
        %s322 = smul.u32 2, %s24
        %p323 = scmp.lt.s32.totalorder %s25, 1
        %s324 = scalar_select %p323, %s25, 1
        %p325 = scmp.lt.s32.totalorder %s322, 1
        %s326 = scalar_select %p325, %s322, 1
        %s327 = smul.addr %s324, 2
        %s328 = sadd.s32 %s326, %s327
        %s329 = smul.addr %s328, 4
        %s330 = scalar_lea.vmem %s1, %s329
        %s331 = smul.u32 2, %s24
        %s332 = smul.u32 16, %s24
        %p333 = scmp.lt.s32.totalorder %s332, 15
        %s334 = scalar_select %p333, %s332, 15
        %s335 = smul.addr %s334, 4
        %s336 = scalar_lea.vmem %s4, %s335
        %s337 = smul.u32 16, %s24
        %s338 = smul.u32 2, %s24
        %v340 = vld [vmem:[%s320] sm:$0xf]
        %v341 = vld [vmem:[%s320 + $0x4] sm:$0xf]
        %v342 = vld [vmem:[%s330] sm:$0xf]
        %v343 = vld [vmem:[%s330 + $0x4] sm:$0xf]
        %v344 = vld [vmem:[%s2] sm:$0xf]
        %v345 = vld [vmem:[%s2 + $0x4] sm:$0xf]
        %v346 = vld [vmem:[%s2 + $0x8] sm:$0xf]
        %v347 = vld [vmem:[%s2 + $0xc] sm:$0xf]
        %v348 = vld [vmem:[%s2 + $0x10] sm:$0xf]
        %v349 = vld [vmem:[%s2 + $0x14] sm:$0xf]
        %v350 = vld [vmem:[%s2 + $0x18] sm:$0xf]
        %v351 = vld [vmem:[%s2 + $0x1c] sm:$0xf]
        %v352 = vld [vmem:[%s2 + $0x20] sm:$0xf]
        %v353 = vld [vmem:[%s2 + $0x24] sm:$0xf]
        %v354 = vld [vmem:[%s2 + $0x28] sm:$0xf]
        %v355 = vld [vmem:[%s2 + $0x2c] sm:$0xf]
        %v356 = vld [vmem:[%s2 + $0x30] sm:$0xf]
        %v357 = vld [vmem:[%s2 + $0x34] sm:$0xf]
        %v358 = vld [vmem:[%s2 + $0x38] sm:$0xf]
        %v359 = vld [vmem:[%s2 + $0x3c] sm:$0xf]
        %v362 = vunpack.c.l.b16 %v340
        %v363 = vunpack.c.l.b16 %v341
        %v364 = vpack.c.b16 %v363, %v362
        %v382 = vunpack.c.l.b16 %v344
        %v383 = vunpack.c.l.b16 %v345
        %v384 = vunpack.c.l.b16 %v346
        %v385 = vunpack.c.l.b16 %v347
        %v386 = vunpack.c.l.b16 %v348
        %v387 = vunpack.c.l.b16 %v349
        %v388 = vunpack.c.l.b16 %v350
        %v389 = vunpack.c.l.b16 %v351
        %v390 = vunpack.c.l.b16 %v352
        %v391 = vunpack.c.l.b16 %v353
        %v392 = vunpack.c.l.b16 %v354
        %v393 = vunpack.c.l.b16 %v355
        %v394 = vunpack.c.l.b16 %v356
        %v395 = vunpack.c.l.b16 %v357
        %v396 = vunpack.c.l.b16 %v358
        %v397 = vunpack.c.l.b16 %v359
        %v398 = vpack.c.b16 %v383, %v382
        %v399 = vpack.c.b16 %v385, %v384
        %v400 = vpack.c.b16 %v387, %v386
        %v401 = vpack.c.b16 %v389, %v388
        %v402 = vpack.c.b16 %v391, %v390
        %v403 = vpack.c.b16 %v393, %v392
        %v404 = vpack.c.b16 %v395, %v394
        %v405 = vpack.c.b16 %v397, %v396
        %414 = vmatprep.subr.bf16.mxu0 0
        %415 = vmatpush1.bf16.msra.mxu0 %v398
        %416 = vmatprep.subr.bf16.mxu0 0
        %417 = vmatpush1.bf16.msra.mxu0 %v399
        %418 = vmatprep.subr.bf16.mxu0 0
        %419 = vmatpush1.bf16.msra.mxu0 %v400
        %420 = vmatprep.subr.bf16.mxu0 0
        %421 = vmatpush1.bf16.msra.mxu0 %v401
        %422 = vmatprep.subr.bf16.mxu0 0
        %423 = vmatpush1.bf16.msra.mxu0 %v402
        %424 = vmatprep.subr.bf16.mxu0 0
        %425 = vmatpush1.bf16.msra.mxu0 %v403
        %426 = vmatprep.subr.bf16.mxu0 0
        %427 = vmatpush1.bf16.msra.mxu0 %v404
        %428 = vmatprep.subr.bf16.mxu0 0
        %429 = vmatpush1.bf16.msra.mxu0 %v405
        %430 = vmatprep.subr.bf16.mxu0 0
        %431 = vmatpush1.bf16.msra.mxu0 0
        %432 = vmatprep.subr.bf16.mxu0 0
        %433 = vmatpush1.bf16.msra.mxu0 0
        %434 = vmatprep.subr.bf16.mxu0 0
        %435 = vmatpush1.bf16.msra.mxu0 0
        %436 = vmatprep.subr.bf16.mxu0 0
        %437 = vmatpush1.bf16.msra.mxu0 0
        %438 = vmatprep.subr.bf16.mxu0 0
        %439 = vmatpush1.bf16.msra.mxu0 0
        %440 = vmatprep.subr.bf16.mxu0 0
        %441 = vmatpush1.bf16.msra.mxu0 0
        %442 = vmatprep.subr.bf16.mxu0 0
        %443 = vmatpush1.bf16.msra.mxu0 0
        %444 = vmatprep.subr.bf16.mxu0 0
        %445 = vmatpush1.bf16.msra.mxu0 0
        %446 = vmatprep.mubr.bf16.mxu0 0
        %447 = vmatmul.mubr.bf16.gmra.mrb[0].mxu0 %v364
        %v448 = vpop.f32.mrb[0].mxu0
        %v449 = vadd.f32 0.0, %v448
        %v450 = vpop.f32.mrb[0].mxu0
        %v451 = vpop.f32.mrb[0].mxu0
        %v452 = vadd.f32 0.0, %v451
        %v453 = vpop.f32.mrb[0].mxu0
        %454 = vdwg.mxu0
        %v457 = vcombine.high %v449, %v449
        %v458 = vcombine.high %v452, %v452
        %v461 = vld [vmem:[%s3] sm:$0xf]
        %v462 = vld [vmem:[%s3 + $0x4] sm:$0xf]
        %v463 = vld [vmem:[%s3 + $0x8] sm:$0xf]
        %v464 = vld [vmem:[%s3 + $0xc] sm:$0xf]
        %v465 = vld [vmem:[%s3 + $0x10] sm:$0xf]
        %v466 = vld [vmem:[%s3 + $0x14] sm:$0xf]
        %v467 = vld [vmem:[%s3 + $0x18] sm:$0xf]
        %v468 = vld [vmem:[%s3 + $0x1c] sm:$0xf]
        %v469 = vld [vmem:[%s3 + $0x20] sm:$0xf]
        %v470 = vld [vmem:[%s3 + $0x24] sm:$0xf]
        %v471 = vld [vmem:[%s3 + $0x28] sm:$0xf]
        %v472 = vld [vmem:[%s3 + $0x2c] sm:$0xf]
        %v473 = vld [vmem:[%s3 + $0x30] sm:$0xf]
        %v474 = vld [vmem:[%s3 + $0x34] sm:$0xf]
        %v475 = vld [vmem:[%s3 + $0x38] sm:$0xf]
        %v476 = vld [vmem:[%s3 + $0x3c] sm:$0xf]
        %v479 = vunpack.c.l.b16 %v342
        %v480 = vunpack.c.l.b16 %v343
        %v481 = vpack.c.b16 %v480, %v479
        %v499 = vunpack.c.l.b16 %v461
        %v500 = vunpack.c.l.b16 %v462
        %v501 = vunpack.c.l.b16 %v463
        %v502 = vunpack.c.l.b16 %v464
        %v503 = vunpack.c.l.b16 %v465
        %v504 = vunpack.c.l.b16 %v466
        %v505 = vunpack.c.l.b16 %v467
        %v506 = vunpack.c.l.b16 %v468
        %v507 = vunpack.c.l.b16 %v469
        %v508 = vunpack.c.l.b16 %v470
        %v509 = vunpack.c.l.b16 %v471
        %v510 = vunpack.c.l.b16 %v472
        %v511 = vunpack.c.l.b16 %v473
        %v512 = vunpack.c.l.b16 %v474
        %v513 = vunpack.c.l.b16 %v475
        %v514 = vunpack.c.l.b16 %v476
        %v515 = vpack.c.b16 %v500, %v499
        %v516 = vpack.c.b16 %v502, %v501
        %v517 = vpack.c.b16 %v504, %v503
        %v518 = vpack.c.b16 %v506, %v505
        %v519 = vpack.c.b16 %v508, %v507
        %v520 = vpack.c.b16 %v510, %v509
        %v521 = vpack.c.b16 %v512, %v511
        %v522 = vpack.c.b16 %v514, %v513
        %531 = vmatprep.subr.bf16.mxu0 0
        %532 = vmatpush1.bf16.msra.mxu0 %v515
        %533 = vmatprep.subr.bf16.mxu0 0
        %534 = vmatpush1.bf16.msra.mxu0 %v516
        %535 = vmatprep.subr.bf16.mxu0 0
        %536 = vmatpush1.bf16.msra.mxu0 %v517
        %537 = vmatprep.subr.bf16.mxu0 0
        %538 = vmatpush1.bf16.msra.mxu0 %v518
        %539 = vmatprep.subr.bf16.mxu0 0
        %540 = vmatpush1.bf16.msra.mxu0 %v519
        %541 = vmatprep.subr.bf16.mxu0 0
        %542 = vmatpush1.bf16.msra.mxu0 %v520
        %543 = vmatprep.subr.bf16.mxu0 0
        %544 = vmatpush1.bf16.msra.mxu0 %v521
        %545 = vmatprep.subr.bf16.mxu0 0
        %546 = vmatpush1.bf16.msra.mxu0 %v522
        %547 = vmatprep.subr.bf16.mxu0 0
        %548 = vmatpush1.bf16.msra.mxu0 0
        %549 = vmatprep.subr.bf16.mxu0 0
        %550 = vmatpush1.bf16.msra.mxu0 0
        %551 = vmatprep.subr.bf16.mxu0 0
        %552 = vmatpush1.bf16.msra.mxu0 0
        %553 = vmatprep.subr.bf16.mxu0 0
        %554 = vmatpush1.bf16.msra.mxu0 0
        %555 = vmatprep.subr.bf16.mxu0 0
        %556 = vmatpush1.bf16.msra.mxu0 0
        %557 = vmatprep.subr.bf16.mxu0 0
        %558 = vmatpush1.bf16.msra.mxu0 0
        %559 = vmatprep.subr.bf16.mxu0 0
        %560 = vmatpush1.bf16.msra.mxu0 0
        %561 = vmatprep.subr.bf16.mxu0 0
        %562 = vmatpush1.bf16.msra.mxu0 0
        %563 = vmatprep.mubr.bf16.mxu0 0
        %564 = vmatmul.mubr.bf16.gmra.mrb[0].mxu0 %v481
        %v565 = vpop.f32.mrb[0].mxu0
        %v566 = vadd.f32 0.0, %v565
        %v567 = vpop.f32.mrb[0].mxu0
        %v568 = vpop.f32.mrb[0].mxu0
        %v569 = vadd.f32 0.0, %v568
        %v570 = vpop.f32.mrb[0].mxu0
        %571 = vdwg.mxu0
        %v574 = vcombine.high %v566, %v566
        %v575 = vcombine.high %v569, %v569
        %v578 = vpack.c.bf16 %v449, %v449
        %v579 = vpack.c.bf16 %v457, %v457
        %v580 = vpack.c.bf16 %v452, %v452
        %v581 = vpack.c.bf16 %v458, %v458
        %v582 = vpack.c.bf16 %v566, %v566
        %v583 = vpack.c.bf16 %v574, %v574
        %v584 = vpack.c.bf16 %v569, %v569
        %v585 = vpack.c.bf16 %v575, %v575
        %v586 = vsub.bf16 0, %v582
        %v587 = vsub.bf16 0, %v583
        %v588 = vsub.bf16 0, %v584
        %v589 = vsub.bf16 0, %v585
        %vm590 = vcmask 31744
        %v593 = vsel %vm590, %v582, %v586
        %v596 = vsel %vm590, %v583, %v587
        %v599 = vsel %vm590, %v584, %v588
        %v602 = vsel %vm590, %v585, %v589
        %607 = vrot.lane.b32.xlu0 %v582, 124
        %v608 = vpop.permute.xlu0 %607
        %609 = vrot.lane.b32.xlu0 %v583, 124
        %v610 = vpop.permute.xlu0 %609
        %611 = vrot.lane.b32.xlu0 %v584, 124
        %v612 = vpop.permute.xlu0 %611
        %613 = vrot.lane.b32.xlu0 %v585, 124
        %v614 = vpop.permute.xlu0 %613
        %615 = vrot.lane.b32.xlu0 %v582, 4
        %v616 = vpop.permute.xlu0 %615
        %617 = vrot.lane.b32.xlu0 %v583, 4
        %v618 = vpop.permute.xlu0 %617
        %619 = vrot.lane.b32.xlu0 %v584, 4
        %v620 = vpop.permute.xlu0 %619
        %621 = vrot.lane.b32.xlu0 %v585, 4
        %v622 = vpop.permute.xlu0 %621
        %v625 = vsel %vm590, %v608, %v616
        %v628 = vsel %vm590, %v610, %v618
        %v631 = vsel %vm590, %v612, %v620
        %v634 = vsel %vm590, %v614, %v622
        %v639 = vrot.slane %v625, 6
        %v640 = vrot.slane %v628, 6
        %v641 = vrot.slane %v631, 6
        %v642 = vrot.slane %v634, 6
        %vm643 = vcmask 1041408
        %v645 = vsel %vm643, %v593, %v639
        %v647 = vsel %vm643, %v596, %v640
        %v649 = vsel %vm643, %v599, %v641
        %v651 = vsel %vm643, %v602, %v642
        %vm652 = vcmask 64512
        %v654 = vsel %vm652, %v578, 0
        %v656 = vsel %vm652, %v645, 0
        %658 = vmatprep.subr.bf16.mxu0 0
        %659 = vmatpush1.bf16.xpose.msra.mxu0 %v656
        %660 = vmatprep.subr.bf16.mxu0 0
        %661 = vmatpush1.bf16.xpose.msra.mxu0 0
        %662 = vmatprep.subr.bf16.mxu0 0
        %663 = vmatpush1.bf16.xpose.msra.mxu0 0
        %664 = vmatprep.subr.bf16.mxu0 0
        %665 = vmatpush1.bf16.xpose.msra.mxu0 0
        %666 = vmatprep.subr.bf16.mxu0 0
        %667 = vmatpush1.bf16.xpose.msra.mxu0 0
        %668 = vmatprep.subr.bf16.mxu0 0
        %669 = vmatpush1.bf16.xpose.msra.mxu0 0
        %670 = vmatprep.subr.bf16.mxu0 0
        %671 = vmatpush1.bf16.xpose.msra.mxu0 0
        %672 = vmatprep.subr.bf16.mxu0 0
        %673 = vmatpush1.bf16.xpose.msra.mxu0 0
        %674 = vmatprep.subr.bf16.mxu0 0
        %675 = vmatpush1.bf16.xpose.msra.mxu0 0
        %676 = vmatprep.subr.bf16.mxu0 0
        %677 = vmatpush1.bf16.xpose.msra.mxu0 0
        %678 = vmatprep.subr.bf16.mxu0 0
        %679 = vmatpush1.bf16.xpose.msra.mxu0 0
        %680 = vmatprep.subr.bf16.mxu0 0
        %681 = vmatpush1.bf16.xpose.msra.mxu0 0
        %682 = vmatprep.subr.bf16.mxu0 0
        %683 = vmatpush1.bf16.xpose.msra.mxu0 0
        %684 = vmatprep.subr.bf16.mxu0 0
        %685 = vmatpush1.bf16.xpose.msra.mxu0 0
        %686 = vmatprep.subr.bf16.mxu0 0
        %687 = vmatpush1.bf16.xpose.msra.mxu0 0
        %688 = vmatprep.subr.bf16.mxu0 0
        %689 = vmatpush1.bf16.xpose.msra.mxu0 0
        %690 = vmatprep.mubr.bf16.mxu0 0
        %691 = vmatmul.mubr.bf16.gmra.mrb[0].mxu0 %v654
        %v692 = vpop.f32.mrb[0].mxu0
        %v693 = vadd.f32 0.0, %v692
        %v694 = vpop.f32.mrb[0].mxu0
        %v695 = vpop.f32.mrb[0].mxu0
        %v696 = vpop.f32.mrb[0].mxu0
        %697 = vdwg.mxu0
        %v699 = vsel %vm652, %v579, 0
        %v701 = vsel %vm652, %v647, 0
        %703 = vmatprep.subr.bf16.mxu0 0
        %704 = vmatpush1.bf16.xpose.msra.mxu0 %v701
        %705 = vmatprep.subr.bf16.mxu0 0
        %706 = vmatpush1.bf16.xpose.msra.mxu0 0
        %707 = vmatprep.subr.bf16.mxu0 0
        %708 = vmatpush1.bf16.xpose.msra.mxu0 0
        %709 = vmatprep.subr.bf16.mxu0 0
        %710 = vmatpush1.bf16.xpose.msra.mxu0 0
        %711 = vmatprep.subr.bf16.mxu0 0
        %712 = vmatpush1.bf16.xpose.msra.mxu0 0
        %713 = vmatprep.subr.bf16.mxu0 0
        %714 = vmatpush1.bf16.xpose.msra.mxu0 0
        %715 = vmatprep.subr.bf16.mxu0 0
        %716 = vmatpush1.bf16.xpose.msra.mxu0 0
        %717 = vmatprep.subr.bf16.mxu0 0
        %718 = vmatpush1.bf16.xpose.msra.mxu0 0
        %719 = vmatprep.subr.bf16.mxu0 0
        %720 = vmatpush1.bf16.xpose.msra.mxu0 0
        %721 = vmatprep.subr.bf16.mxu0 0
        %722 = vmatpush1.bf16.xpose.msra.mxu0 0
        %723 = vmatprep.subr.bf16.mxu0 0
        %724 = vmatpush1.bf16.xpose.msra.mxu0 0
        %725 = vmatprep.subr.bf16.mxu0 0
        %726 = vmatpush1.bf16.xpose.msra.mxu0 0
        %727 = vmatprep.subr.bf16.mxu0 0
        %728 = vmatpush1.bf16.xpose.msra.mxu0 0
        %729 = vmatprep.subr.bf16.mxu0 0
        %730 = vmatpush1.bf16.xpose.msra.mxu0 0
        %731 = vmatprep.subr.bf16.mxu0 0
        %732 = vmatpush1.bf16.xpose.msra.mxu0 0
        %733 = vmatprep.subr.bf16.mxu0 0
        %734 = vmatpush1.bf16.xpose.msra.mxu0 0
        %735 = vmatprep.mubr.bf16.mxu0 0
        %736 = vmatmul.mubr.bf16.gmra.mrb[0].mxu0 %v699
        %v737 = vpop.f32.mrb[0].mxu0
        %v738 = vadd.f32 0.0, %v737
        %v739 = vpop.f32.mrb[0].mxu0
        %v740 = vpop.f32.mrb[0].mxu0
        %v741 = vpop.f32.mrb[0].mxu0
        %742 = vdwg.mxu0
        %v744 = vsel %vm652, %v580, 0
        %v746 = vsel %vm652, %v649, 0
        %748 = vmatprep.subr.bf16.mxu0 0
        %749 = vmatpush1.bf16.xpose.msra.mxu0 %v746
        %750 = vmatprep.subr.bf16.mxu0 0
        %751 = vmatpush1.bf16.xpose.msra.mxu0 0
        %752 = vmatprep.subr.bf16.mxu0 0
        %753 = vmatpush1.bf16.xpose.msra.mxu0 0
        %754 = vmatprep.subr.bf16.mxu0 0
        %755 = vmatpush1.bf16.xpose.msra.mxu0 0
        %756 = vmatprep.subr.bf16.mxu0 0
        %757 = vmatpush1.bf16.xpose.msra.mxu0 0
        %758 = vmatprep.subr.bf16.mxu0 0
        %759 = vmatpush1.bf16.xpose.msra.mxu0 0
        %760 = vmatprep.subr.bf16.mxu0 0
        %761 = vmatpush1.bf16.xpose.msra.mxu0 0
        %762 = vmatprep.subr.bf16.mxu0 0
        %763 = vmatpush1.bf16.xpose.msra.mxu0 0
        %764 = vmatprep.subr.bf16.mxu0 0
        %765 = vmatpush1.bf16.xpose.msra.mxu0 0
        %766 = vmatprep.subr.bf16.mxu0 0
        %767 = vmatpush1.bf16.xpose.msra.mxu0 0
        %768 = vmatprep.subr.bf16.mxu0 0
        %769 = vmatpush1.bf16.xpose.msra.mxu0 0
        %770 = vmatprep.subr.bf16.mxu0 0
        %771 = vmatpush1.bf16.xpose.msra.mxu0 0
        %772 = vmatprep.subr.bf16.mxu0 0
        %773 = vmatpush1.bf16.xpose.msra.mxu0 0
        %774 = vmatprep.subr.bf16.mxu0 0
        %775 = vmatpush1.bf16.xpose.msra.mxu0 0
        %776 = vmatprep.subr.bf16.mxu0 0
        %777 = vmatpush1.bf16.xpose.msra.mxu0 0
        %778 = vmatprep.subr.bf16.mxu0 0
        %779 = vmatpush1.bf16.xpose.msra.mxu0 0
        %780 = vmatprep.mubr.bf16.mxu0 0
        %781 = vmatmul.mubr.bf16.gmra.mrb[0].mxu0 %v744
        %v782 = vpop.f32.mrb[0].mxu0
        %v783 = vadd.f32 0.0, %v782
        %v784 = vpop.f32.mrb[0].mxu0
        %v785 = vpop.f32.mrb[0].mxu0
        %v786 = vpop.f32.mrb[0].mxu0
        %787 = vdwg.mxu0
        %v789 = vsel %vm652, %v581, 0
        %v791 = vsel %vm652, %v651, 0
        %793 = vmatprep.subr.bf16.mxu0 0
        %794 = vmatpush1.bf16.xpose.msra.mxu0 %v791
        %795 = vmatprep.subr.bf16.mxu0 0
        %796 = vmatpush1.bf16.xpose.msra.mxu0 0
        %797 = vmatprep.subr.bf16.mxu0 0
        %798 = vmatpush1.bf16.xpose.msra.mxu0 0
        %799 = vmatprep.subr.bf16.mxu0 0
        %800 = vmatpush1.bf16.xpose.msra.mxu0 0
        %801 = vmatprep.subr.bf16.mxu0 0
        %802 = vmatpush1.bf16.xpose.msra.mxu0 0
        %803 = vmatprep.subr.bf16.mxu0 0
        %804 = vmatpush1.bf16.xpose.msra.mxu0 0
        %805 = vmatprep.subr.bf16.mxu0 0
        %806 = vmatpush1.bf16.xpose.msra.mxu0 0
        %807 = vmatprep.subr.bf16.mxu0 0
        %808 = vmatpush1.bf16.xpose.msra.mxu0 0
        %809 = vmatprep.subr.bf16.mxu0 0
        %810 = vmatpush1.bf16.xpose.msra.mxu0 0
        %811 = vmatprep.subr.bf16.mxu0 0
        %812 = vmatpush1.bf16.xpose.msra.mxu0 0
        %813 = vmatprep.subr.bf16.mxu0 0
        %814 = vmatpush1.bf16.xpose.msra.mxu0 0
        %815 = vmatprep.subr.bf16.mxu0 0
        %816 = vmatpush1.bf16.xpose.msra.mxu0 0
        %817 = vmatprep.subr.bf16.mxu0 0
        %818 = vmatpush1.bf16.xpose.msra.mxu0 0
        %819 = vmatprep.subr.bf16.mxu0 0
        %820 = vmatpush1.bf16.xpose.msra.mxu0 0
        %821 = vmatprep.subr.bf16.mxu0 0
        %822 = vmatpush1.bf16.xpose.msra.mxu0 0
        %823 = vmatprep.subr.bf16.mxu0 0
        %824 = vmatpush1.bf16.xpose.msra.mxu0 0
        %825 = vmatprep.mubr.bf16.mxu0 0
        %826 = vmatmul.mubr.bf16.gmra.mrb[0].mxu0 %v789
        %v827 = vpop.f32.mrb[0].mxu0
        %v828 = vadd.f32 0.0, %v827
        %v829 = vpop.f32.mrb[0].mxu0
        %v830 = vpop.f32.mrb[0].mxu0
        %v831 = vpop.f32.mrb[0].mxu0
        %832 = vdwg.mxu0
        %v833 = vmax.f32 %v693, -20.0
        %v834 = vmax.f32 %v738, -20.0
        %v835 = vmax.f32 %v783, -20.0
        %v836 = vmax.f32 %v828, -20.0
        %v837 = vmin.f32 %v833, 20.0
        %v838 = vmin.f32 %v834, 20.0
        %v839 = vmin.f32 %v835, 20.0
        %v840 = vmin.f32 %v836, 20.0
        %v841 = vmul.f32 %v837, 2.0
        %v842 = vmul.f32 %v838, 2.0
        %v843 = vmul.f32 %v839, 2.0
        %v844 = vmul.f32 %v840, 2.0
        %v845 = vmul.f32 %v841, 1.442695
        %v846 = vpow.pop %v845
        %v847 = vmul.f32 %v842, 1.442695
        %v848 = vpow.pop %v847
        %v849 = vmul.f32 %v843, 1.442695
        %v850 = vpow.pop %v849
        %v851 = vmul.f32 %v844, 1.442695
        %v852 = vpow.pop %v851
        %v853 = vmul.f32 %v837, -2.0
        %v854 = vmul.f32 %v838, -2.0
        %v855 = vmul.f32 %v839, -2.0
        %v856 = vmul.f32 %v840, -2.0
        %v857 = vmul.f32 %v853, 1.442695
        %v858 = vpow.pop %v857
        %v859 = vmul.f32 %v854, 1.442695
        %v860 = vpow.pop %v859
        %v861 = vmul.f32 %v855, 1.442695
        %v862 = vpow.pop %v861
        %v863 = vmul.f32 %v856, 1.442695
        %v864 = vpow.pop %v863
        %v865 = vsub.f32 %v846, %v858
        %v866 = vsub.f32 %v848, %v860
        %v867 = vsub.f32 %v850, %v862
        %v868 = vsub.f32 %v852, %v864
        %v869 = vmul.f32 %v865, 0.5
        %v870 = vmul.f32 %v866, 0.5
        %v871 = vmul.f32 %v867, 0.5
        %v872 = vmul.f32 %v868, 0.5
        %v873 = vadd.f32 %v846, %v858
        %v874 = vadd.f32 %v848, %v860
        %v875 = vadd.f32 %v850, %v862
        %v876 = vadd.f32 %v852, %v864
        %v877 = vmul.f32 %v873, 0.5
        %v878 = vmul.f32 %v874, 0.5
        %v879 = vmul.f32 %v875, 0.5
        %v880 = vmul.f32 %v876, 0.5
        %v881 = vmul.f32 %v693, 2.0
        %v882 = vmul.f32 %v738, 2.0
        %v883 = vmul.f32 %v783, 2.0
        %v884 = vmul.f32 %v828, 2.0
        %v885 = vmul.f32 %v881, 0.15915494
        %v886 = vmul.f32 %v882, 0.15915494
        %v887 = vmul.f32 %v883, 0.15915494
        %v888 = vmul.f32 %v884, 0.15915494
        %v889 = vadd.f32 %v885, 0.5
        %v890 = vadd.f32 %v886, 0.5
        %v891 = vadd.f32 %v887, 0.5
        %v892 = vadd.f32 %v888, 0.5
        %v893 = vfloor.f32 %v889
        %v894 = vfloor.f32 %v890
        %v895 = vfloor.f32 %v891
        %v896 = vfloor.f32 %v892
        %v897 = vmul.f32 %v893, 6.28125
        %v898 = vmul.f32 %v894, 6.28125
        %v899 = vmul.f32 %v895, 6.28125
        %v900 = vmul.f32 %v896, 6.28125
        %v901 = vsub.f32 %v881, %v897
        %v902 = vsub.f32 %v882, %v898
        %v903 = vsub.f32 %v883, %v899
        %v904 = vsub.f32 %v884, %v900
        %v905 = vmul.f32 %v893, 0.0019353072
        %v906 = vmul.f32 %v894, 0.0019353072
        %v907 = vmul.f32 %v895, 0.0019353072
        %v908 = vmul.f32 %v896, 0.0019353072
        %v909 = vsub.f32 %v901, %v905
        %v910 = vsub.f32 %v902, %v906
        %v911 = vsub.f32 %v903, %v907
        %v912 = vsub.f32 %v904, %v908
        %v913 = vmul.f32 %v909, %v909
        %v914 = vmul.f32 %v910, %v910
        %v915 = vmul.f32 %v911, %v911
        %v916 = vmul.f32 %v912, %v912
        %v917 = vmul.f32 %v913, -7.6471636e-13
        %v918 = vmul.f32 %v914, -7.6471636e-13
        %v919 = vmul.f32 %v915, -7.6471636e-13
        %v920 = vmul.f32 %v916, -7.6471636e-13
        %v921 = vadd.f32 %v917, 1.6059044e-10
        %v922 = vadd.f32 %v918, 1.6059044e-10
        %v923 = vadd.f32 %v919, 1.6059044e-10
        %v924 = vadd.f32 %v920, 1.6059044e-10
        %v925 = vmul.f32 %v913, %v921
        %v926 = vmul.f32 %v914, %v922
        %v927 = vmul.f32 %v915, %v923
        %v928 = vmul.f32 %v916, %v924
        %v929 = vadd.f32 %v925, -2.5052108e-08
        %v930 = vadd.f32 %v926, -2.5052108e-08
        %v931 = vadd.f32 %v927, -2.5052108e-08
        %v932 = vadd.f32 %v928, -2.5052108e-08
        %v933 = vmul.f32 %v913, %v929
        %v934 = vmul.f32 %v914, %v930
        %v935 = vmul.f32 %v915, %v931
        %v936 = vmul.f32 %v916, %v932
        %v937 = vadd.f32 %v933, 2.7557319e-06
        %v938 = vadd.f32 %v934, 2.7557319e-06
        %v939 = vadd.f32 %v935, 2.7557319e-06
        %v940 = vadd.f32 %v936, 2.7557319e-06
        %v941 = vmul.f32 %v913, %v937
        %v942 = vmul.f32 %v914, %v938
        %v943 = vmul.f32 %v915, %v939
        %v944 = vmul.f32 %v916, %v940
        %v945 = vadd.f32 %v941, -0.0001984127
        %v946 = vadd.f32 %v942, -0.0001984127
        %v947 = vadd.f32 %v943, -0.0001984127
        %v948 = vadd.f32 %v944, -0.0001984127
        %v949 = vmul.f32 %v913, %v945
        %v950 = vmul.f32 %v914, %v946
        %v951 = vmul.f32 %v915, %v947
        %v952 = vmul.f32 %v916, %v948
        %v953 = vadd.f32 %v949, 0.008333334
        %v954 = vadd.f32 %v950, 0.008333334
        %v955 = vadd.f32 %v951, 0.008333334
        %v956 = vadd.f32 %v952, 0.008333334
        %v957 = vmul.f32 %v913, %v953
        %v958 = vmul.f32 %v914, %v954
        %v959 = vmul.f32 %v915, %v955
        %v960 = vmul.f32 %v916, %v956
        %v961 = vadd.f32 %v957, -0.16666667
        %v962 = vadd.f32 %v958, -0.16666667
        %v963 = vadd.f32 %v959, -0.16666667
        %v964 = vadd.f32 %v960, -0.16666667
        %v965 = vmul.f32 %v913, %v961
        %v966 = vmul.f32 %v914, %v962
        %v967 = vmul.f32 %v915, %v963
        %v968 = vmul.f32 %v916, %v964
        %v969 = vadd.f32 %v965, 1.0
        %v970 = vadd.f32 %v966, 1.0
        %v971 = vadd.f32 %v967, 1.0
        %v972 = vadd.f32 %v968, 1.0
        %v973 = vmul.f32 %v909, %v969
        %v974 = vmul.f32 %v910, %v970
        %v975 = vmul.f32 %v911, %v971
        %v976 = vmul.f32 %v912, %v972
        %v977 = vmul.f32 %v913, -1.1470745e-11
        %v978 = vmul.f32 %v914, -1.1470745e-11
        %v979 = vmul.f32 %v915, -1.1470745e-11
        %v980 = vmul.f32 %v916, -1.1470745e-11
        %v981 = vadd.f32 %v977, 2.0876756e-09
        %v982 = vadd.f32 %v978, 2.0876756e-09
        %v983 = vadd.f32 %v979, 2.0876756e-09
        %v984 = vadd.f32 %v980, 2.0876756e-09
        %v985 = vmul.f32 %v913, %v981
        %v986 = vmul.f32 %v914, %v982
        %v987 = vmul.f32 %v915, %v983
        %v988 = vmul.f32 %v916, %v984
        %v989 = vadd.f32 %v985, -2.755732e-07
        %v990 = vadd.f32 %v986, -2.755732e-07
        %v991 = vadd.f32 %v987, -2.755732e-07
        %v992 = vadd.f32 %v988, -2.755732e-07
        %v993 = vmul.f32 %v913, %v989
        %v994 = vmul.f32 %v914, %v990
        %v995 = vmul.f32 %v915, %v991
        %v996 = vmul.f32 %v916, %v992
        %v997 = vadd.f32 %v993, 2.4801588e-05
        %v998 = vadd.f32 %v994, 2.4801588e-05
        %v999 = vadd.f32 %v995, 2.4801588e-05
        %v1000 = vadd.f32 %v996, 2.4801588e-05
        %v1001 = vmul.f32 %v913, %v997
        %v1002 = vmul.f32 %v914, %v998
        %v1003 = vmul.f32 %v915, %v999
        %v1004 = vmul.f32 %v916, %v1000
        %v1005 = vadd.f32 %v1001, -0.0013888889
        %v1006 = vadd.f32 %v1002, -0.0013888889
        %v1007 = vadd.f32 %v1003, -0.0013888889
        %v1008 = vadd.f32 %v1004, -0.0013888889
        %v1009 = vmul.f32 %v913, %v1005
        %v1010 = vmul.f32 %v914, %v1006
        %v1011 = vmul.f32 %v915, %v1007
        %v1012 = vmul.f32 %v916, %v1008
        %v1013 = vadd.f32 %v1009, 0.041666668
        %v1014 = vadd.f32 %v1010, 0.041666668
        %v1015 = vadd.f32 %v1011, 0.041666668
        %v1016 = vadd.f32 %v1012, 0.041666668
        %v1017 = vmul.f32 %v913, %v1013
        %v1018 = vmul.f32 %v914, %v1014
        %v1019 = vmul.f32 %v915, %v1015
        %v1020 = vmul.f32 %v916, %v1016
        %v1021 = vadd.f32 %v1017, -0.5
        %v1022 = vadd.f32 %v1018, -0.5
        %v1023 = vadd.f32 %v1019, -0.5
        %v1024 = vadd.f32 %v1020, -0.5
        %v1025 = vmul.f32 %v913, %v1021
        %v1026 = vmul.f32 %v914, %v1022
        %v1027 = vmul.f32 %v915, %v1023
        %v1028 = vmul.f32 %v916, %v1024
        %v1029 = vadd.f32 %v1025, 1.0
        %v1030 = vadd.f32 %v1026, 1.0
        %v1031 = vadd.f32 %v1027, 1.0
        %v1032 = vadd.f32 %v1028, 1.0
        %1037 = vrot.lane.b32.xlu0 %v1029, 124
        %v1038 = vpop.permute.xlu0 %1037
        %1039 = vrot.lane.b32.xlu0 %v1030, 124
        %v1040 = vpop.permute.xlu0 %1039
        %1041 = vrot.lane.b32.xlu0 %v1031, 124
        %v1042 = vpop.permute.xlu0 %1041
        %1043 = vrot.lane.b32.xlu0 %v1032, 124
        %v1044 = vpop.permute.xlu0 %1043
        %v1049 = vadd.f32 %v877, %v1038
        %v1050 = vadd.f32 %v878, %v1040
        %v1051 = vadd.f32 %v879, %v1042
        %v1052 = vadd.f32 %v880, %v1044
        %v1053 = vrcp.pop %v1049
        %v1054 = vmul.f32 %v869, %v1053
        %v1055 = vrcp.pop %v1050
        %v1056 = vmul.f32 %v870, %v1055
        %v1057 = vrcp.pop %v1051
        %v1058 = vmul.f32 %v871, %v1057
        %v1059 = vrcp.pop %v1052
        %v1060 = vmul.f32 %v872, %v1059
        %1065 = vrot.lane.b32.xlu0 %v1049, 4
        %v1066 = vpop.permute.xlu0 %1065
        %1067 = vrot.lane.b32.xlu0 %v1050, 4
        %v1068 = vpop.permute.xlu0 %1067
        %1069 = vrot.lane.b32.xlu0 %v1051, 4
        %v1070 = vpop.permute.xlu0 %1069
        %1071 = vrot.lane.b32.xlu0 %v1052, 4
        %v1072 = vpop.permute.xlu0 %1071
        %v1077 = vrcp.pop %v1066
        %v1078 = vmul.f32 %v973, %v1077
        %v1079 = vrcp.pop %v1068
        %v1080 = vmul.f32 %v974, %v1079
        %v1081 = vrcp.pop %v1070
        %v1082 = vmul.f32 %v975, %v1081
        %v1083 = vrcp.pop %v1072
        %v1084 = vmul.f32 %v976, %v1083
        %v1085 = vpack.c.bf16 %v1054, %v1054
        %v1086 = vpack.c.bf16 %v1056, %v1056
        %v1087 = vpack.c.bf16 %v1058, %v1058
        %v1088 = vpack.c.bf16 %v1060, %v1060
        %v1089 = vpack.c.bf16 %v1078, %v1078
        %v1090 = vpack.c.bf16 %v1080, %v1080
        %v1091 = vpack.c.bf16 %v1082, %v1082
        %v1092 = vpack.c.bf16 %v1084, %v1084
        %v1095 = vsel %vm590, %v1085, %v1089
        %v1098 = vsel %vm590, %v1086, %v1090
        %v1101 = vsel %vm590, %v1087, %v1091
        %v1104 = vsel %vm590, %v1088, %v1092
        %1109 = vrot.lane.b32.xlu0 %v586, 124
        %v1110 = vpop.permute.xlu0 %1109
        %1111 = vrot.lane.b32.xlu0 %v587, 124
        %v1112 = vpop.permute.xlu0 %1111
        %1113 = vrot.lane.b32.xlu0 %v588, 124
        %v1114 = vpop.permute.xlu0 %1113
        %1115 = vrot.lane.b32.xlu0 %v589, 124
        %v1116 = vpop.permute.xlu0 %1115
        %v1118 = vsel %vm590, %v1110, %v616
        %v1120 = vsel %vm590, %v1112, %v618
        %v1122 = vsel %vm590, %v1114, %v620
        %v1124 = vsel %vm590, %v1116, %v622
        %v1129 = vrot.slane %v1118, 6
        %v1130 = vrot.slane %v1120, 6
        %v1131 = vrot.slane %v1122, 6
        %v1132 = vrot.slane %v1124, 6
        %v1134 = vsel %vm643, %v582, %v1129
        %v1136 = vsel %vm643, %v583, %v1130
        %v1138 = vsel %vm643, %v584, %v1131
        %v1140 = vsel %vm643, %v585, %v1132
        %v1141 = vsel %vm652, %v1095, 0
        %vm1143 = vcmask 1043456
        %v1144 = vsel %vm1143, %v1134, 0
        %1146 = vmatprep.subr.bf16.mxu0 0
        %1147 = vmatpush1.bf16.msra.mxu0 %v1144
        %1148 = vmatprep.subr.bf16.mxu0 0
        %1149 = vmatpush1.bf16.msra.mxu0 0
        %1150 = vmatprep.subr.bf16.mxu0 0
        %1151 = vmatpush1.bf16.msra.mxu0 0
        %1152 = vmatprep.subr.bf16.mxu0 0
        %1153 = vmatpush1.bf16.msra.mxu0 0
        %1154 = vmatprep.subr.bf16.mxu0 0
        %1155 = vmatpush1.bf16.msra.mxu0 0
        %1156 = vmatprep.subr.bf16.mxu0 0
        %1157 = vmatpush1.bf16.msra.mxu0 0
        %1158 = vmatprep.subr.bf16.mxu0 0
        %1159 = vmatpush1.bf16.msra.mxu0 0
        %1160 = vmatprep.subr.bf16.mxu0 0
        %1161 = vmatpush1.bf16.msra.mxu0 0
        %1162 = vmatprep.subr.bf16.mxu0 0
        %1163 = vmatpush1.bf16.msra.mxu0 0
        %1164 = vmatprep.subr.bf16.mxu0 0
        %1165 = vmatpush1.bf16.msra.mxu0 0
        %1166 = vmatprep.subr.bf16.mxu0 0
        %1167 = vmatpush1.bf16.msra.mxu0 0
        %1168 = vmatprep.subr.bf16.mxu0 0
        %1169 = vmatpush1.bf16.msra.mxu0 0
        %1170 = vmatprep.subr.bf16.mxu0 0
        %1171 = vmatpush1.bf16.msra.mxu0 0
        %1172 = vmatprep.subr.bf16.mxu0 0
        %1173 = vmatpush1.bf16.msra.mxu0 0
        %1174 = vmatprep.subr.bf16.mxu0 0
        %1175 = vmatpush1.bf16.msra.mxu0 0
        %1176 = vmatprep.subr.bf16.mxu0 0
        %1177 = vmatpush1.bf16.msra.mxu0 0
        %1178 = vmatprep.mubr.bf16.mxu0 0
        %1179 = vmatmul.mubr.bf16.gmra.mrb[0].mxu0 %v1141
        %v1180 = vpop.f32.mrb[0].mxu0
        %v1181 = vadd.f32 0.0, %v1180
        %v1182 = vpop.f32.mrb[0].mxu0
        %v1183 = vpop.f32.mrb[0].mxu0
        %v1184 = vpop.f32.mrb[0].mxu0
        %1185 = vdwg.mxu0
        %v1186 = vsel %vm652, %v1098, 0
        %v1188 = vsel %vm1143, %v1136, 0
        %1190 = vmatprep.subr.bf16.mxu0 0
        %1191 = vmatpush1.bf16.msra.mxu0 %v1188
        %1192 = vmatprep.subr.bf16.mxu0 0
        %1193 = vmatpush1.bf16.msra.mxu0 0
        %1194 = vmatprep.subr.bf16.mxu0 0
        %1195 = vmatpush1.bf16.msra.mxu0 0
        %1196 = vmatprep.subr.bf16.mxu0 0
        %1197 = vmatpush1.bf16.msra.mxu0 0
        %1198 = vmatprep.subr.bf16.mxu0 0
        %1199 = vmatpush1.bf16.msra.mxu0 0
        %1200 = vmatprep.subr.bf16.mxu0 0
        %1201 = vmatpush1.bf16.msra.mxu0 0
        %1202 = vmatprep.subr.bf16.mxu0 0
        %1203 = vmatpush1.bf16.msra.mxu0 0
        %1204 = vmatprep.subr.bf16.mxu0 0
        %1205 = vmatpush1.bf16.msra.mxu0 0
        %1206 = vmatprep.subr.bf16.mxu0 0
        %1207 = vmatpush1.bf16.msra.mxu0 0
        %1208 = vmatprep.subr.bf16.mxu0 0
        %1209 = vmatpush1.bf16.msra.mxu0 0
        %1210 = vmatprep.subr.bf16.mxu0 0
        %1211 = vmatpush1.bf16.msra.mxu0 0
        %1212 = vmatprep.subr.bf16.mxu0 0
        %1213 = vmatpush1.bf16.msra.mxu0 0
        %1214 = vmatprep.subr.bf16.mxu0 0
        %1215 = vmatpush1.bf16.msra.mxu0 0
        %1216 = vmatprep.subr.bf16.mxu0 0
        %1217 = vmatpush1.bf16.msra.mxu0 0
        %1218 = vmatprep.subr.bf16.mxu0 0
        %1219 = vmatpush1.bf16.msra.mxu0 0
        %1220 = vmatprep.subr.bf16.mxu0 0
        %1221 = vmatpush1.bf16.msra.mxu0 0
        %1222 = vmatprep.mubr.bf16.mxu0 0
        %1223 = vmatmul.mubr.bf16.gmra.mrb[0].mxu0 %v1186
        %v1224 = vpop.f32.mrb[0].mxu0
        %v1225 = vadd.f32 0.0, %v1224
        %v1226 = vpop.f32.mrb[0].mxu0
        %v1227 = vpop.f32.mrb[0].mxu0
        %v1228 = vpop.f32.mrb[0].mxu0
        %1229 = vdwg.mxu0
        %v1230 = vsel %vm652, %v1101, 0
        %v1232 = vsel %vm1143, %v1138, 0
        %1234 = vmatprep.subr.bf16.mxu0 0
        %1235 = vmatpush1.bf16.msra.mxu0 %v1232
        %1236 = vmatprep.subr.bf16.mxu0 0
        %1237 = vmatpush1.bf16.msra.mxu0 0
        %1238 = vmatprep.subr.bf16.mxu0 0
        %1239 = vmatpush1.bf16.msra.mxu0 0
        %1240 = vmatprep.subr.bf16.mxu0 0
        %1241 = vmatpush1.bf16.msra.mxu0 0
        %1242 = vmatprep.subr.bf16.mxu0 0
        %1243 = vmatpush1.bf16.msra.mxu0 0
        %1244 = vmatprep.subr.bf16.mxu0 0
        %1245 = vmatpush1.bf16.msra.mxu0 0
        %1246 = vmatprep.subr.bf16.mxu0 0
        %1247 = vmatpush1.bf16.msra.mxu0 0
        %1248 = vmatprep.subr.bf16.mxu0 0
        %1249 = vmatpush1.bf16.msra.mxu0 0
        %1250 = vmatprep.subr.bf16.mxu0 0
        %1251 = vmatpush1.bf16.msra.mxu0 0
        %1252 = vmatprep.subr.bf16.mxu0 0
        %1253 = vmatpush1.bf16.msra.mxu0 0
        %1254 = vmatprep.subr.bf16.mxu0 0
        %1255 = vmatpush1.bf16.msra.mxu0 0
        %1256 = vmatprep.subr.bf16.mxu0 0
        %1257 = vmatpush1.bf16.msra.mxu0 0
        %1258 = vmatprep.subr.bf16.mxu0 0
        %1259 = vmatpush1.bf16.msra.mxu0 0
        %1260 = vmatprep.subr.bf16.mxu0 0
        %1261 = vmatpush1.bf16.msra.mxu0 0
        %1262 = vmatprep.subr.bf16.mxu0 0
        %1263 = vmatpush1.bf16.msra.mxu0 0
        %1264 = vmatprep.subr.bf16.mxu0 0
        %1265 = vmatpush1.bf16.msra.mxu0 0
        %1266 = vmatprep.mubr.bf16.mxu0 0
        %1267 = vmatmul.mubr.bf16.gmra.mrb[0].mxu0 %v1230
        %v1268 = vpop.f32.mrb[0].mxu0
        %v1269 = vadd.f32 0.0, %v1268
        %v1270 = vpop.f32.mrb[0].mxu0
        %v1271 = vpop.f32.mrb[0].mxu0
        %v1272 = vpop.f32.mrb[0].mxu0
        %1273 = vdwg.mxu0
        %v1274 = vsel %vm652, %v1104, 0
        %v1276 = vsel %vm1143, %v1140, 0
        %1278 = vmatprep.subr.bf16.mxu0 0
        %1279 = vmatpush1.bf16.msra.mxu0 %v1276
        %1280 = vmatprep.subr.bf16.mxu0 0
        %1281 = vmatpush1.bf16.msra.mxu0 0
        %1282 = vmatprep.subr.bf16.mxu0 0
        %1283 = vmatpush1.bf16.msra.mxu0 0
        %1284 = vmatprep.subr.bf16.mxu0 0
        %1285 = vmatpush1.bf16.msra.mxu0 0
        %1286 = vmatprep.subr.bf16.mxu0 0
        %1287 = vmatpush1.bf16.msra.mxu0 0
        %1288 = vmatprep.subr.bf16.mxu0 0
        %1289 = vmatpush1.bf16.msra.mxu0 0
        %1290 = vmatprep.subr.bf16.mxu0 0
        %1291 = vmatpush1.bf16.msra.mxu0 0
        %1292 = vmatprep.subr.bf16.mxu0 0
        %1293 = vmatpush1.bf16.msra.mxu0 0
        %1294 = vmatprep.subr.bf16.mxu0 0
        %1295 = vmatpush1.bf16.msra.mxu0 0
        %1296 = vmatprep.subr.bf16.mxu0 0
        %1297 = vmatpush1.bf16.msra.mxu0 0
        %1298 = vmatprep.subr.bf16.mxu0 0
        %1299 = vmatpush1.bf16.msra.mxu0 0
        %1300 = vmatprep.subr.bf16.mxu0 0
        %1301 = vmatpush1.bf16.msra.mxu0 0
        %1302 = vmatprep.subr.bf16.mxu0 0
        %1303 = vmatpush1.bf16.msra.mxu0 0
        %1304 = vmatprep.subr.bf16.mxu0 0
        %1305 = vmatpush1.bf16.msra.mxu0 0
        %1306 = vmatprep.subr.bf16.mxu0 0
        %1307 = vmatpush1.bf16.msra.mxu0 0
        %1308 = vmatprep.subr.bf16.mxu0 0
        %1309 = vmatpush1.bf16.msra.mxu0 0
        %1310 = vmatprep.mubr.bf16.mxu0 0
        %1311 = vmatmul.mubr.bf16.gmra.mrb[0].mxu0 %v1274
        %v1312 = vpop.f32.mrb[0].mxu0
        %v1313 = vadd.f32 0.0, %v1312
        %v1314 = vpop.f32.mrb[0].mxu0
        %v1315 = vpop.f32.mrb[0].mxu0
        %v1316 = vpop.f32.mrb[0].mxu0
        %1317 = vdwg.mxu0
        %v1318 = vpack.c.bf16 %v1181, %v1181
        %v1319 = vpack.c.bf16 %v1225, %v1225
        %v1320 = vpack.c.bf16 %v1269, %v1269
        %v1321 = vpack.c.bf16 %v1313, %v1313
        %v1327 = vunpack.c.l.s4 1966171168
        %v1328 = vunpack.c.0.s8 %v1327
        %v1329 = vlaneseq
        %v1330 = vshrl.u32 %v1329, 7
        %v1331 = vsub.s32 %v1328, %v1330
        %v1332 = vrot.slane %v1318, %v1331
        %v1333 = vcombine.high %v1332, %v1332
        %v1335 = vunpack.c.l.s4 1966171168
        %v1336 = vunpack.c.0.s8 %v1335
        %v1337 = vlaneseq
        %v1338 = vshrl.u32 %v1337, 7
        %v1339 = vsub.s32 %v1336, %v1338
        %v1340 = vrot.slane %v1332, %v1339
        %v1342 = vunpack.c.l.s4 1966171168
        %v1343 = vunpack.c.0.s8 %v1342
        %v1344 = vlaneseq
        %v1345 = vshrl.u32 %v1344, 7
        %v1346 = vsub.s32 %v1343, %v1345
        %v1347 = vrot.slane %v1333, %v1346
        %v1349 = vunpack.c.l.s4 1966171168
        %v1350 = vunpack.c.0.s8 %v1349
        %v1351 = vlaneseq
        %v1352 = vshrl.u32 %v1351, 7
        %v1353 = vsub.s32 %v1350, %v1352
        %v1354 = vrot.slane %v1319, %v1353
        %v1355 = vcombine.high %v1354, %v1354
        %v1357 = vunpack.c.l.s4 1966171168
        %v1358 = vunpack.c.0.s8 %v1357
        %v1359 = vlaneseq
        %v1360 = vshrl.u32 %v1359, 7
        %v1361 = vsub.s32 %v1358, %v1360
        %v1362 = vrot.slane %v1354, %v1361
        %v1364 = vunpack.c.l.s4 1966171168
        %v1365 = vunpack.c.0.s8 %v1364
        %v1366 = vlaneseq
        %v1367 = vshrl.u32 %v1366, 7
        %v1368 = vsub.s32 %v1365, %v1367
        %v1369 = vrot.slane %v1355, %v1368
        %v1371 = vunpack.c.l.s4 1966171168
        %v1372 = vunpack.c.0.s8 %v1371
        %v1373 = vlaneseq
        %v1374 = vshrl.u32 %v1373, 7
        %v1375 = vsub.s32 %v1372, %v1374
        %v1376 = vrot.slane %v1320, %v1375
        %v1377 = vcombine.high %v1376, %v1376
        %v1379 = vunpack.c.l.s4 1966171168
        %v1380 = vunpack.c.0.s8 %v1379
        %v1381 = vlaneseq
        %v1382 = vshrl.u32 %v1381, 7
        %v1383 = vsub.s32 %v1380, %v1382
        %v1384 = vrot.slane %v1376, %v1383
        %v1386 = vunpack.c.l.s4 1966171168
        %v1387 = vunpack.c.0.s8 %v1386
        %v1388 = vlaneseq
        %v1389 = vshrl.u32 %v1388, 7
        %v1390 = vsub.s32 %v1387, %v1389
        %v1391 = vrot.slane %v1377, %v1390
        %v1393 = vunpack.c.l.s4 1966171168
        %v1394 = vunpack.c.0.s8 %v1393
        %v1395 = vlaneseq
        %v1396 = vshrl.u32 %v1395, 7
        %v1397 = vsub.s32 %v1394, %v1396
        %v1398 = vrot.slane %v1321, %v1397
        %v1399 = vcombine.high %v1398, %v1398
        %v1401 = vunpack.c.l.s4 1966171168
        %v1402 = vunpack.c.0.s8 %v1401
        %v1403 = vlaneseq
        %v1404 = vshrl.u32 %v1403, 7
        %v1405 = vsub.s32 %v1402, %v1404
        %v1406 = vrot.slane %v1398, %v1405
        %v1408 = vunpack.c.l.s4 1966171168
        %v1409 = vunpack.c.0.s8 %v1408
        %v1410 = vlaneseq
        %v1411 = vshrl.u32 %v1410, 7
        %v1412 = vsub.s32 %v1409, %v1411
        %v1413 = vrot.slane %v1399, %v1412
        %v1414 = vunpack.i.l.s16 %v1340
        %v1415 = vunpack.i.h.s16 %v1340
        %v1416 = vunpack.i.l.s16 %v1347
        %v1417 = vunpack.i.h.s16 %v1347
        %v1418 = vunpack.i.l.s16 %v1362
        %v1419 = vunpack.i.h.s16 %v1362
        %v1420 = vunpack.i.l.s16 %v1369
        %v1421 = vunpack.i.h.s16 %v1369
        %v1422 = vunpack.i.l.s16 %v1384
        %v1423 = vunpack.i.h.s16 %v1384
        %v1424 = vunpack.i.l.s16 %v1391
        %v1425 = vunpack.i.h.s16 %v1391
        %v1426 = vunpack.i.l.s16 %v1406
        %v1427 = vunpack.i.h.s16 %v1406
        %v1428 = vunpack.i.l.s16 %v1413
        %v1429 = vunpack.i.h.s16 %v1413
        %v1430 = vpack.i.b16 %v1414, %v1414
        %v1431 = vpack.i.b16 %v1415, %v1415
        %v1432 = vpack.i.b16 %v1416, %v1416
        %v1433 = vpack.i.b16 %v1417, %v1417
        %v1434 = vpack.i.b16 %v1418, %v1418
        %v1435 = vpack.i.b16 %v1419, %v1419
        %v1436 = vpack.i.b16 %v1420, %v1420
        %v1437 = vpack.i.b16 %v1421, %v1421
        %v1438 = vpack.i.b16 %v1422, %v1422
        %v1439 = vpack.i.b16 %v1423, %v1423
        %v1440 = vpack.i.b16 %v1424, %v1424
        %v1441 = vpack.i.b16 %v1425, %v1425
        %v1442 = vpack.i.b16 %v1426, %v1426
        %v1443 = vpack.i.b16 %v1427, %v1427
        %v1444 = vpack.i.b16 %v1428, %v1428
        %v1445 = vpack.i.b16 %v1429, %v1429
        %vm1462 = vcmask 57344
        %vm1463 = vsmask.f32 256
        %vm1464 = vmand %vm1462, %vm1463
        %v1465 = vld [vmem:[#allocation2] sm:$0x1]
        %v1466 = vsel %vm1464, %v1430, %v1465
        %1467 = vst [vmem:[#allocation2] sm:$0x1] %v1466
        %v1468 = vld [vmem:[#allocation2 + $0x1] sm:$0x1]
        %v1469 = vsel %vm1464, %v1431, %v1468
        %1470 = vst [vmem:[#allocation2 + $0x1] sm:$0x1] %v1469
        %v1471 = vld [vmem:[#allocation2 + $0x2] sm:$0x1]
        %v1472 = vsel %vm1464, %v1432, %v1471
        %1473 = vst [vmem:[#allocation2 + $0x2] sm:$0x1] %v1472
        %v1474 = vld [vmem:[#allocation2 + $0x3] sm:$0x1]
        %v1475 = vsel %vm1464, %v1433, %v1474
        %1476 = vst [vmem:[#allocation2 + $0x3] sm:$0x1] %v1475
        %v1477 = vld [vmem:[#allocation2 + $0x4] sm:$0x1]
        %v1478 = vsel %vm1464, %v1434, %v1477
        %1479 = vst [vmem:[#allocation2 + $0x4] sm:$0x1] %v1478
        %v1480 = vld [vmem:[#allocation2 + $0x5] sm:$0x1]
        %v1481 = vsel %vm1464, %v1435, %v1480
        %1482 = vst [vmem:[#allocation2 + $0x5] sm:$0x1] %v1481
        %v1483 = vld [vmem:[#allocation2 + $0x6] sm:$0x1]
        %v1484 = vsel %vm1464, %v1436, %v1483
        %1485 = vst [vmem:[#allocation2 + $0x6] sm:$0x1] %v1484
        %v1486 = vld [vmem:[#allocation2 + $0x7] sm:$0x1]
        %v1487 = vsel %vm1464, %v1437, %v1486
        %1488 = vst [vmem:[#allocation2 + $0x7] sm:$0x1] %v1487
        %v1489 = vld [vmem:[#allocation2 + $0x8] sm:$0x1]
        %v1490 = vsel %vm1464, %v1438, %v1489
        %1491 = vst [vmem:[#allocation2 + $0x8] sm:$0x1] %v1490
        %v1492 = vld [vmem:[#allocation2 + $0x9] sm:$0x1]
        %v1493 = vsel %vm1464, %v1439, %v1492
        %1494 = vst [vmem:[#allocation2 + $0x9] sm:$0x1] %v1493
        %v1495 = vld [vmem:[#allocation2 + $0xa] sm:$0x1]
        %v1496 = vsel %vm1464, %v1440, %v1495
        %1497 = vst [vmem:[#allocation2 + $0xa] sm:$0x1] %v1496
        %v1498 = vld [vmem:[#allocation2 + $0xb] sm:$0x1]
        %v1499 = vsel %vm1464, %v1441, %v1498
        %1500 = vst [vmem:[#allocation2 + $0xb] sm:$0x1] %v1499
        %v1501 = vld [vmem:[#allocation2 + $0xc] sm:$0x1]
        %v1502 = vsel %vm1464, %v1442, %v1501
        %1503 = vst [vmem:[#allocation2 + $0xc] sm:$0x1] %v1502
        %v1504 = vld [vmem:[#allocation2 + $0xd] sm:$0x1]
        %v1505 = vsel %vm1464, %v1443, %v1504
        %1506 = vst [vmem:[#allocation2 + $0xd] sm:$0x1] %v1505
        %v1507 = vld [vmem:[#allocation2 + $0xe] sm:$0x1]
        %v1508 = vsel %vm1464, %v1444, %v1507
        %1509 = vst [vmem:[#allocation2 + $0xe] sm:$0x1] %v1508
        %v1510 = vld [vmem:[#allocation2 + $0xf] sm:$0x1]
        %v1511 = vsel %vm1464, %v1445, %v1510
        %1512 = vst [vmem:[#allocation2 + $0xf] sm:$0x1] %v1511
        %v1513 = vld [vmem:[#allocation2] sm:$0x1]
        %v1514 = vld [vmem:[#allocation2 + $0x1] sm:$0x1]
        %v1515 = vld [vmem:[#allocation2 + $0x2] sm:$0x1]
        %v1516 = vld [vmem:[#allocation2 + $0x3] sm:$0x1]
        %v1517 = vld [vmem:[#allocation2 + $0x4] sm:$0x1]
        %v1518 = vld [vmem:[#allocation2 + $0x5] sm:$0x1]
        %v1519 = vld [vmem:[#allocation2 + $0x6] sm:$0x1]
        %v1520 = vld [vmem:[#allocation2 + $0x7] sm:$0x1]
        %v1521 = vld [vmem:[#allocation2 + $0x8] sm:$0x1]
        %v1522 = vld [vmem:[#allocation2 + $0x9] sm:$0x1]
        %v1523 = vld [vmem:[#allocation2 + $0xa] sm:$0x1]
        %v1524 = vld [vmem:[#allocation2 + $0xb] sm:$0x1]
        %v1525 = vld [vmem:[#allocation2 + $0xc] sm:$0x1]
        %v1526 = vld [vmem:[#allocation2 + $0xd] sm:$0x1]
        %v1527 = vld [vmem:[#allocation2 + $0xe] sm:$0x1]
        %v1528 = vld [vmem:[#allocation2 + $0xf] sm:$0x1]
        %v1529 = vld [vmem:[%s336] sm:$0xf]
        %v1530 = vld [vmem:[%s336 + $0x4] sm:$0xf]
        %v1531 = vld [vmem:[%s336 + $0x8] sm:$0xf]
        %v1532 = vld [vmem:[%s336 + $0xc] sm:$0xf]
        %v1533 = vld [vmem:[%s336 + $0x10] sm:$0xf]
        %v1534 = vld [vmem:[%s336 + $0x14] sm:$0xf]
        %v1535 = vld [vmem:[%s336 + $0x18] sm:$0xf]
        %v1536 = vld [vmem:[%s336 + $0x1c] sm:$0xf]
        %v1537 = vld [vmem:[%s336 + $0x20] sm:$0xf]
        %v1538 = vld [vmem:[%s336 + $0x24] sm:$0xf]
        %v1539 = vld [vmem:[%s336 + $0x28] sm:$0xf]
        %v1540 = vld [vmem:[%s336 + $0x2c] sm:$0xf]
        %v1541 = vld [vmem:[%s336 + $0x30] sm:$0xf]
        %v1542 = vld [vmem:[%s336 + $0x34] sm:$0xf]
        %v1543 = vld [vmem:[%s336 + $0x38] sm:$0xf]
        %v1544 = vld [vmem:[%s336 + $0x3c] sm:$0xf]
        %v1546 = vsel %vm652, %v1513, 0
        %v1549 = vsel %vm1143, %v1529, 0
        %1551 = vmatprep.subr.bf16.mxu0 0
        %1552 = vmatpush1.bf16.msra.mxu0 %v1549
        %1553 = vmatprep.subr.bf16.mxu0 0
        %1554 = vmatpush1.bf16.msra.mxu0 0
        %1555 = vmatprep.subr.bf16.mxu0 0
        %1556 = vmatpush1.bf16.msra.mxu0 0
        %1557 = vmatprep.subr.bf16.mxu0 0
        %1558 = vmatpush1.bf16.msra.mxu0 0
        %1559 = vmatprep.subr.bf16.mxu0 0
        %1560 = vmatpush1.bf16.msra.mxu0 0
        %1561 = vmatprep.subr.bf16.mxu0 0
        %1562 = vmatpush1.bf16.msra.mxu0 0
        %1563 = vmatprep.subr.bf16.mxu0 0
        %1564 = vmatpush1.bf16.msra.mxu0 0
        %1565 = vmatprep.subr.bf16.mxu0 0
        %1566 = vmatpush1.bf16.msra.mxu0 0
        %1567 = vmatprep.subr.bf16.mxu0 0
        %1568 = vmatpush1.bf16.msra.mxu0 0
        %1569 = vmatprep.subr.bf16.mxu0 0
        %1570 = vmatpush1.bf16.msra.mxu0 0
        %1571 = vmatprep.subr.bf16.mxu0 0
        %1572 = vmatpush1.bf16.msra.mxu0 0
        %1573 = vmatprep.subr.bf16.mxu0 0
        %1574 = vmatpush1.bf16.msra.mxu0 0
        %1575 = vmatprep.subr.bf16.mxu0 0
        %1576 = vmatpush1.bf16.msra.mxu0 0
        %1577 = vmatprep.subr.bf16.mxu0 0
        %1578 = vmatpush1.bf16.msra.mxu0 0
        %1579 = vmatprep.subr.bf16.mxu0 0
        %1580 = vmatpush1.bf16.msra.mxu0 0
        %1581 = vmatprep.subr.bf16.mxu0 0
        %1582 = vmatpush1.bf16.msra.mxu0 0
        %1583 = vmatprep.mubr.bf16.mxu0 0
        %1584 = vmatmul.mubr.bf16.gmra.mrb[0].mxu0 %v1546
        %v1585 = vpop.f32.mrb[0].mxu0
        %v1586 = vadd.f32 0.0, %v1585
        %v1587 = vpop.f32.mrb[0].mxu0
        %v1588 = vpop.f32.mrb[0].mxu0
        %v1589 = vpop.f32.mrb[0].mxu0
        %1590 = vdwg.mxu0
        %v1592 = vsel %vm652, %v1514, 0
        %v1595 = vsel %vm1143, %v1530, 0
        %1597 = vmatprep.subr.bf16.mxu0 0
        %1598 = vmatpush1.bf16.msra.mxu0 %v1595
        %1599 = vmatprep.subr.bf16.mxu0 0
        %1600 = vmatpush1.bf16.msra.mxu0 0
        %1601 = vmatprep.subr.bf16.mxu0 0
        %1602 = vmatpush1.bf16.msra.mxu0 0
        %1603 = vmatprep.subr.bf16.mxu0 0
        %1604 = vmatpush1.bf16.msra.mxu0 0
        %1605 = vmatprep.subr.bf16.mxu0 0
        %1606 = vmatpush1.bf16.msra.mxu0 0
        %1607 = vmatprep.subr.bf16.mxu0 0
        %1608 = vmatpush1.bf16.msra.mxu0 0
        %1609 = vmatprep.subr.bf16.mxu0 0
        %1610 = vmatpush1.bf16.msra.mxu0 0
        %1611 = vmatprep.subr.bf16.mxu0 0
        %1612 = vmatpush1.bf16.msra.mxu0 0
        %1613 = vmatprep.subr.bf16.mxu0 0
        %1614 = vmatpush1.bf16.msra.mxu0 0
        %1615 = vmatprep.subr.bf16.mxu0 0
        %1616 = vmatpush1.bf16.msra.mxu0 0
        %1617 = vmatprep.subr.bf16.mxu0 0
        %1618 = vmatpush1.bf16.msra.mxu0 0
        %1619 = vmatprep.subr.bf16.mxu0 0
        %1620 = vmatpush1.bf16.msra.mxu0 0
        %1621 = vmatprep.subr.bf16.mxu0 0
        %1622 = vmatpush1.bf16.msra.mxu0 0
        %1623 = vmatprep.subr.bf16.mxu0 0
        %1624 = vmatpush1.bf16.msra.mxu0 0
        %1625 = vmatprep.subr.bf16.mxu0 0
        %1626 = vmatpush1.bf16.msra.mxu0 0
        %1627 = vmatprep.subr.bf16.mxu0 0
        %1628 = vmatpush1.bf16.msra.mxu0 0
        %1629 = vmatprep.mubr.bf16.mxu0 0
        %1630 = vmatmul.mubr.bf16.gmra.mrb[0].mxu0 %v1592
        %v1631 = vpop.f32.mrb[0].mxu0
        %v1632 = vadd.f32 0.0, %v1631
        %v1633 = vpop.f32.mrb[0].mxu0
        %v1634 = vpop.f32.mrb[0].mxu0
        %v1635 = vpop.f32.mrb[0].mxu0
        %1636 = vdwg.mxu0
        %v1638 = vsel %vm652, %v1515, 0
        %v1641 = vsel %vm1143, %v1531, 0
        %1643 = vmatprep.subr.bf16.mxu0 0
        %1644 = vmatpush1.bf16.msra.mxu0 %v1641
        %1645 = vmatprep.subr.bf16.mxu0 0
        %1646 = vmatpush1.bf16.msra.mxu0 0
        %1647 = vmatprep.subr.bf16.mxu0 0
        %1648 = vmatpush1.bf16.msra.mxu0 0
        %1649 = vmatprep.subr.bf16.mxu0 0
        %1650 = vmatpush1.bf16.msra.mxu0 0
        %1651 = vmatprep.subr.bf16.mxu0 0
        %1652 = vmatpush1.bf16.msra.mxu0 0
        %1653 = vmatprep.subr.bf16.mxu0 0
        %1654 = vmatpush1.bf16.msra.mxu0 0
        %1655 = vmatprep.subr.bf16.mxu0 0
        %1656 = vmatpush1.bf16.msra.mxu0 0
        %1657 = vmatprep.subr.bf16.mxu0 0
        %1658 = vmatpush1.bf16.msra.mxu0 0
        %1659 = vmatprep.subr.bf16.mxu0 0
        %1660 = vmatpush1.bf16.msra.mxu0 0
        %1661 = vmatprep.subr.bf16.mxu0 0
        %1662 = vmatpush1.bf16.msra.mxu0 0
        %1663 = vmatprep.subr.bf16.mxu0 0
        %1664 = vmatpush1.bf16.msra.mxu0 0
        %1665 = vmatprep.subr.bf16.mxu0 0
        %1666 = vmatpush1.bf16.msra.mxu0 0
        %1667 = vmatprep.subr.bf16.mxu0 0
        %1668 = vmatpush1.bf16.msra.mxu0 0
        %1669 = vmatprep.subr.bf16.mxu0 0
        %1670 = vmatpush1.bf16.msra.mxu0 0
        %1671 = vmatprep.subr.bf16.mxu0 0
        %1672 = vmatpush1.bf16.msra.mxu0 0
        %1673 = vmatprep.subr.bf16.mxu0 0
        %1674 = vmatpush1.bf16.msra.mxu0 0
        %1675 = vmatprep.mubr.bf16.mxu0 0
        %1676 = vmatmul.mubr.bf16.gmra.mrb[0].mxu0 %v1638
        %v1677 = vpop.f32.mrb[0].mxu0
        %v1678 = vadd.f32 0.0, %v1677
        %v1679 = vpop.f32.mrb[0].mxu0
        %v1680 = vpop.f32.mrb[0].mxu0
        %v1681 = vpop.f32.mrb[0].mxu0
        %1682 = vdwg.mxu0
        %v1684 = vsel %vm652, %v1516, 0
        %v1687 = vsel %vm1143, %v1532, 0
        %1689 = vmatprep.subr.bf16.mxu0 0
        %1690 = vmatpush1.bf16.msra.mxu0 %v1687
        %1691 = vmatprep.subr.bf16.mxu0 0
        %1692 = vmatpush1.bf16.msra.mxu0 0
        %1693 = vmatprep.subr.bf16.mxu0 0
        %1694 = vmatpush1.bf16.msra.mxu0 0
        %1695 = vmatprep.subr.bf16.mxu0 0
        %1696 = vmatpush1.bf16.msra.mxu0 0
        %1697 = vmatprep.subr.bf16.mxu0 0
        %1698 = vmatpush1.bf16.msra.mxu0 0
        %1699 = vmatprep.subr.bf16.mxu0 0
        %1700 = vmatpush1.bf16.msra.mxu0 0
        %1701 = vmatprep.subr.bf16.mxu0 0
        %1702 = vmatpush1.bf16.msra.mxu0 0
        %1703 = vmatprep.subr.bf16.mxu0 0
        %1704 = vmatpush1.bf16.msra.mxu0 0
        %1705 = vmatprep.subr.bf16.mxu0 0
        %1706 = vmatpush1.bf16.msra.mxu0 0
        %1707 = vmatprep.subr.bf16.mxu0 0
        %1708 = vmatpush1.bf16.msra.mxu0 0
        %1709 = vmatprep.subr.bf16.mxu0 0
        %1710 = vmatpush1.bf16.msra.mxu0 0
        %1711 = vmatprep.subr.bf16.mxu0 0
        %1712 = vmatpush1.bf16.msra.mxu0 0
        %1713 = vmatprep.subr.bf16.mxu0 0
        %1714 = vmatpush1.bf16.msra.mxu0 0
        %1715 = vmatprep.subr.bf16.mxu0 0
        %1716 = vmatpush1.bf16.msra.mxu0 0
        %1717 = vmatprep.subr.bf16.mxu0 0
        %1718 = vmatpush1.bf16.msra.mxu0 0
        %1719 = vmatprep.subr.bf16.mxu0 0
        %1720 = vmatpush1.bf16.msra.mxu0 0
        %1721 = vmatprep.mubr.bf16.mxu0 0
        %1722 = vmatmul.mubr.bf16.gmra.mrb[0].mxu0 %v1684
        %v1723 = vpop.f32.mrb[0].mxu0
        %v1724 = vadd.f32 0.0, %v1723
        %v1725 = vpop.f32.mrb[0].mxu0
        %v1726 = vpop.f32.mrb[0].mxu0
        %v1727 = vpop.f32.mrb[0].mxu0
        %1728 = vdwg.mxu0
        %v1730 = vsel %vm652, %v1517, 0
        %v1733 = vsel %vm1143, %v1533, 0
        %1735 = vmatprep.subr.bf16.mxu0 0
        %1736 = vmatpush1.bf16.msra.mxu0 %v1733
        %1737 = vmatprep.subr.bf16.mxu0 0
        %1738 = vmatpush1.bf16.msra.mxu0 0
        %1739 = vmatprep.subr.bf16.mxu0 0
        %1740 = vmatpush1.bf16.msra.mxu0 0
        %1741 = vmatprep.subr.bf16.mxu0 0
        %1742 = vmatpush1.bf16.msra.mxu0 0
        %1743 = vmatprep.subr.bf16.mxu0 0
        %1744 = vmatpush1.bf16.msra.mxu0 0
        %1745 = vmatprep.subr.bf16.mxu0 0
        %1746 = vmatpush1.bf16.msra.mxu0 0
        %1747 = vmatprep.subr.bf16.mxu0 0
        %1748 = vmatpush1.bf16.msra.mxu0 0
        %1749 = vmatprep.subr.bf16.mxu0 0
        %1750 = vmatpush1.bf16.msra.mxu0 0
        %1751 = vmatprep.subr.bf16.mxu0 0
        %1752 = vmatpush1.bf16.msra.mxu0 0
        %1753 = vmatprep.subr.bf16.mxu0 0
        %1754 = vmatpush1.bf16.msra.mxu0 0
        %1755 = vmatprep.subr.bf16.mxu0 0
        %1756 = vmatpush1.bf16.msra.mxu0 0
        %1757 = vmatprep.subr.bf16.mxu0 0
        %1758 = vmatpush1.bf16.msra.mxu0 0
        %1759 = vmatprep.subr.bf16.mxu0 0
        %1760 = vmatpush1.bf16.msra.mxu0 0
        %1761 = vmatprep.subr.bf16.mxu0 0
        %1762 = vmatpush1.bf16.msra.mxu0 0
        %1763 = vmatprep.subr.bf16.mxu0 0
        %1764 = vmatpush1.bf16.msra.mxu0 0
        %1765 = vmatprep.subr.bf16.mxu0 0
        %1766 = vmatpush1.bf16.msra.mxu0 0
        %1767 = vmatprep.mubr.bf16.mxu0 0
        %1768 = vmatmul.mubr.bf16.gmra.mrb[0].mxu0 %v1730
        %v1769 = vpop.f32.mrb[0].mxu0
        %v1770 = vadd.f32 0.0, %v1769
        %v1771 = vpop.f32.mrb[0].mxu0
        %v1772 = vpop.f32.mrb[0].mxu0
        %v1773 = vpop.f32.mrb[0].mxu0
        %1774 = vdwg.mxu0
        %v1776 = vsel %vm652, %v1518, 0
        %v1779 = vsel %vm1143, %v1534, 0
        %1781 = vmatprep.subr.bf16.mxu0 0
        %1782 = vmatpush1.bf16.msra.mxu0 %v1779
        %1783 = vmatprep.subr.bf16.mxu0 0
        %1784 = vmatpush1.bf16.msra.mxu0 0
        %1785 = vmatprep.subr.bf16.mxu0 0
        %1786 = vmatpush1.bf16.msra.mxu0 0
        %1787 = vmatprep.subr.bf16.mxu0 0
        %1788 = vmatpush1.bf16.msra.mxu0 0
        %1789 = vmatprep.subr.bf16.mxu0 0
        %1790 = vmatpush1.bf16.msra.mxu0 0
        %1791 = vmatprep.subr.bf16.mxu0 0
        %1792 = vmatpush1.bf16.msra.mxu0 0
        %1793 = vmatprep.subr.bf16.mxu0 0
        %1794 = vmatpush1.bf16.msra.mxu0 0
        %1795 = vmatprep.subr.bf16.mxu0 0
        %1796 = vmatpush1.bf16.msra.mxu0 0
        %1797 = vmatprep.subr.bf16.mxu0 0
        %1798 = vmatpush1.bf16.msra.mxu0 0
        %1799 = vmatprep.subr.bf16.mxu0 0
        %1800 = vmatpush1.bf16.msra.mxu0 0
        %1801 = vmatprep.subr.bf16.mxu0 0
        %1802 = vmatpush1.bf16.msra.mxu0 0
        %1803 = vmatprep.subr.bf16.mxu0 0
        %1804 = vmatpush1.bf16.msra.mxu0 0
        %1805 = vmatprep.subr.bf16.mxu0 0
        %1806 = vmatpush1.bf16.msra.mxu0 0
        %1807 = vmatprep.subr.bf16.mxu0 0
        %1808 = vmatpush1.bf16.msra.mxu0 0
        %1809 = vmatprep.subr.bf16.mxu0 0
        %1810 = vmatpush1.bf16.msra.mxu0 0
        %1811 = vmatprep.subr.bf16.mxu0 0
        %1812 = vmatpush1.bf16.msra.mxu0 0
        %1813 = vmatprep.mubr.bf16.mxu0 0
        %1814 = vmatmul.mubr.bf16.gmra.mrb[0].mxu0 %v1776
        %v1815 = vpop.f32.mrb[0].mxu0
        %v1816 = vadd.f32 0.0, %v1815
        %v1817 = vpop.f32.mrb[0].mxu0
        %v1818 = vpop.f32.mrb[0].mxu0
        %v1819 = vpop.f32.mrb[0].mxu0
        %1820 = vdwg.mxu0
        %v1822 = vsel %vm652, %v1519, 0
        %v1825 = vsel %vm1143, %v1535, 0
        %1827 = vmatprep.subr.bf16.mxu0 0
        %1828 = vmatpush1.bf16.msra.mxu0 %v1825
        %1829 = vmatprep.subr.bf16.mxu0 0
        %1830 = vmatpush1.bf16.msra.mxu0 0
        %1831 = vmatprep.subr.bf16.mxu0 0
        %1832 = vmatpush1.bf16.msra.mxu0 0
        %1833 = vmatprep.subr.bf16.mxu0 0
        %1834 = vmatpush1.bf16.msra.mxu0 0
        %1835 = vmatprep.subr.bf16.mxu0 0
        %1836 = vmatpush1.bf16.msra.mxu0 0
        %1837 = vmatprep.subr.bf16.mxu0 0
        %1838 = vmatpush1.bf16.msra.mxu0 0
        %1839 = vmatprep.subr.bf16.mxu0 0
        %1840 = vmatpush1.bf16.msra.mxu0 0
        %1841 = vmatprep.subr.bf16.mxu0 0
        %1842 = vmatpush1.bf16.msra.mxu0 0
        %1843 = vmatprep.subr.bf16.mxu0 0
        %1844 = vmatpush1.bf16.msra.mxu0 0
        %1845 = vmatprep.subr.bf16.mxu0 0
        %1846 = vmatpush1.bf16.msra.mxu0 0
        %1847 = vmatprep.subr.bf16.mxu0 0
        %1848 = vmatpush1.bf16.msra.mxu0 0
        %1849 = vmatprep.subr.bf16.mxu0 0
        %1850 = vmatpush1.bf16.msra.mxu0 0
        %1851 = vmatprep.subr.bf16.mxu0 0
        %1852 = vmatpush1.bf16.msra.mxu0 0
        %1853 = vmatprep.subr.bf16.mxu0 0
        %1854 = vmatpush1.bf16.msra.mxu0 0
        %1855 = vmatprep.subr.bf16.mxu0 0
        %1856 = vmatpush1.bf16.msra.mxu0 0
        %1857 = vmatprep.subr.bf16.mxu0 0
        %1858 = vmatpush1.bf16.msra.mxu0 0
        %1859 = vmatprep.mubr.bf16.mxu0 0
        %1860 = vmatmul.mubr.bf16.gmra.mrb[0].mxu0 %v1822
        %v1861 = vpop.f32.mrb[0].mxu0
        %v1862 = vadd.f32 0.0, %v1861
        %v1863 = vpop.f32.mrb[0].mxu0
        %v1864 = vpop.f32.mrb[0].mxu0
        %v1865 = vpop.f32.mrb[0].mxu0
        %1866 = vdwg.mxu0
        %v1868 = vsel %vm652, %v1520, 0
        %v1871 = vsel %vm1143, %v1536, 0
        %1873 = vmatprep.subr.bf16.mxu0 0
        %1874 = vmatpush1.bf16.msra.mxu0 %v1871
        %1875 = vmatprep.subr.bf16.mxu0 0
        %1876 = vmatpush1.bf16.msra.mxu0 0
        %1877 = vmatprep.subr.bf16.mxu0 0
        %1878 = vmatpush1.bf16.msra.mxu0 0
        %1879 = vmatprep.subr.bf16.mxu0 0
        %1880 = vmatpush1.bf16.msra.mxu0 0
        %1881 = vmatprep.subr.bf16.mxu0 0
        %1882 = vmatpush1.bf16.msra.mxu0 0
        %1883 = vmatprep.subr.bf16.mxu0 0
        %1884 = vmatpush1.bf16.msra.mxu0 0
        %1885 = vmatprep.subr.bf16.mxu0 0
        %1886 = vmatpush1.bf16.msra.mxu0 0
        %1887 = vmatprep.subr.bf16.mxu0 0
        %1888 = vmatpush1.bf16.msra.mxu0 0
        %1889 = vmatprep.subr.bf16.mxu0 0
        %1890 = vmatpush1.bf16.msra.mxu0 0
        %1891 = vmatprep.subr.bf16.mxu0 0
        %1892 = vmatpush1.bf16.msra.mxu0 0
        %1893 = vmatprep.subr.bf16.mxu0 0
        %1894 = vmatpush1.bf16.msra.mxu0 0
        %1895 = vmatprep.subr.bf16.mxu0 0
        %1896 = vmatpush1.bf16.msra.mxu0 0
        %1897 = vmatprep.subr.bf16.mxu0 0
        %1898 = vmatpush1.bf16.msra.mxu0 0
        %1899 = vmatprep.subr.bf16.mxu0 0
        %1900 = vmatpush1.bf16.msra.mxu0 0
        %1901 = vmatprep.subr.bf16.mxu0 0
        %1902 = vmatpush1.bf16.msra.mxu0 0
        %1903 = vmatprep.subr.bf16.mxu0 0
        %1904 = vmatpush1.bf16.msra.mxu0 0
        %1905 = vmatprep.mubr.bf16.mxu0 0
        %1906 = vmatmul.mubr.bf16.gmra.mrb[0].mxu0 %v1868
        %v1907 = vpop.f32.mrb[0].mxu0
        %v1908 = vadd.f32 0.0, %v1907
        %v1909 = vpop.f32.mrb[0].mxu0
        %v1910 = vpop.f32.mrb[0].mxu0
        %v1911 = vpop.f32.mrb[0].mxu0
        %1912 = vdwg.mxu0
        %v1914 = vsel %vm652, %v1521, 0
        %v1917 = vsel %vm1143, %v1537, 0
        %1919 = vmatprep.subr.bf16.mxu0 0
        %1920 = vmatpush1.bf16.msra.mxu0 %v1917
        %1921 = vmatprep.subr.bf16.mxu0 0
        %1922 = vmatpush1.bf16.msra.mxu0 0
        %1923 = vmatprep.subr.bf16.mxu0 0
        %1924 = vmatpush1.bf16.msra.mxu0 0
        %1925 = vmatprep.subr.bf16.mxu0 0
        %1926 = vmatpush1.bf16.msra.mxu0 0
        %1927 = vmatprep.subr.bf16.mxu0 0
        %1928 = vmatpush1.bf16.msra.mxu0 0
        %1929 = vmatprep.subr.bf16.mxu0 0
        %1930 = vmatpush1.bf16.msra.mxu0 0
        %1931 = vmatprep.subr.bf16.mxu0 0
        %1932 = vmatpush1.bf16.msra.mxu0 0
        %1933 = vmatprep.subr.bf16.mxu0 0
        %1934 = vmatpush1.bf16.msra.mxu0 0
        %1935 = vmatprep.subr.bf16.mxu0 0
        %1936 = vmatpush1.bf16.msra.mxu0 0
        %1937 = vmatprep.subr.bf16.mxu0 0
        %1938 = vmatpush1.bf16.msra.mxu0 0
        %1939 = vmatprep.subr.bf16.mxu0 0
        %1940 = vmatpush1.bf16.msra.mxu0 0
        %1941 = vmatprep.subr.bf16.mxu0 0
        %1942 = vmatpush1.bf16.msra.mxu0 0
        %1943 = vmatprep.subr.bf16.mxu0 0
        %1944 = vmatpush1.bf16.msra.mxu0 0
        %1945 = vmatprep.subr.bf16.mxu0 0
        %1946 = vmatpush1.bf16.msra.mxu0 0
        %1947 = vmatprep.subr.bf16.mxu0 0
        %1948 = vmatpush1.bf16.msra.mxu0 0
        %1949 = vmatprep.subr.bf16.mxu0 0
        %1950 = vmatpush1.bf16.msra.mxu0 0
        %1951 = vmatprep.mubr.bf16.mxu0 0
        %1952 = vmatmul.mubr.bf16.gmra.mrb[0].mxu0 %v1914
        %v1953 = vpop.f32.mrb[0].mxu0
        %v1954 = vadd.f32 0.0, %v1953
        %v1955 = vpop.f32.mrb[0].mxu0
        %v1956 = vpop.f32.mrb[0].mxu0
        %v1957 = vpop.f32.mrb[0].mxu0
        %1958 = vdwg.mxu0
        %v1960 = vsel %vm652, %v1522, 0
        %v1963 = vsel %vm1143, %v1538, 0
        %1965 = vmatprep.subr.bf16.mxu0 0
        %1966 = vmatpush1.bf16.msra.mxu0 %v1963
        %1967 = vmatprep.subr.bf16.mxu0 0
        %1968 = vmatpush1.bf16.msra.mxu0 0
        %1969 = vmatprep.subr.bf16.mxu0 0
        %1970 = vmatpush1.bf16.msra.mxu0 0
        %1971 = vmatprep.subr.bf16.mxu0 0
        %1972 = vmatpush1.bf16.msra.mxu0 0
        %1973 = vmatprep.subr.bf16.mxu0 0
        %1974 = vmatpush1.bf16.msra.mxu0 0
        %1975 = vmatprep.subr.bf16.mxu0 0
        %1976 = vmatpush1.bf16.msra.mxu0 0
        %1977 = vmatprep.subr.bf16.mxu0 0
        %1978 = vmatpush1.bf16.msra.mxu0 0
        %1979 = vmatprep.subr.bf16.mxu0 0
        %1980 = vmatpush1.bf16.msra.mxu0 0
        %1981 = vmatprep.subr.bf16.mxu0 0
        %1982 = vmatpush1.bf16.msra.mxu0 0
        %1983 = vmatprep.subr.bf16.mxu0 0
        %1984 = vmatpush1.bf16.msra.mxu0 0
        %1985 = vmatprep.subr.bf16.mxu0 0
        %1986 = vmatpush1.bf16.msra.mxu0 0
        %1987 = vmatprep.subr.bf16.mxu0 0
        %1988 = vmatpush1.bf16.msra.mxu0 0
        %1989 = vmatprep.subr.bf16.mxu0 0
        %1990 = vmatpush1.bf16.msra.mxu0 0
        %1991 = vmatprep.subr.bf16.mxu0 0
        %1992 = vmatpush1.bf16.msra.mxu0 0
        %1993 = vmatprep.subr.bf16.mxu0 0
        %1994 = vmatpush1.bf16.msra.mxu0 0
        %1995 = vmatprep.subr.bf16.mxu0 0
        %1996 = vmatpush1.bf16.msra.mxu0 0
        %1997 = vmatprep.mubr.bf16.mxu0 0
        %1998 = vmatmul.mubr.bf16.gmra.mrb[0].mxu0 %v1960
        %v1999 = vpop.f32.mrb[0].mxu0
        %v2000 = vadd.f32 0.0, %v1999
        %v2001 = vpop.f32.mrb[0].mxu0
        %v2002 = vpop.f32.mrb[0].mxu0
        %v2003 = vpop.f32.mrb[0].mxu0
        %2004 = vdwg.mxu0
        %v2006 = vsel %vm652, %v1523, 0
        %v2009 = vsel %vm1143, %v1539, 0
        %2011 = vmatprep.subr.bf16.mxu0 0
        %2012 = vmatpush1.bf16.msra.mxu0 %v2009
        %2013 = vmatprep.subr.bf16.mxu0 0
        %2014 = vmatpush1.bf16.msra.mxu0 0
        %2015 = vmatprep.subr.bf16.mxu0 0
        %2016 = vmatpush1.bf16.msra.mxu0 0
        %2017 = vmatprep.subr.bf16.mxu0 0
        %2018 = vmatpush1.bf16.msra.mxu0 0
        %2019 = vmatprep.subr.bf16.mxu0 0
        %2020 = vmatpush1.bf16.msra.mxu0 0
        %2021 = vmatprep.subr.bf16.mxu0 0
        %2022 = vmatpush1.bf16.msra.mxu0 0
        %2023 = vmatprep.subr.bf16.mxu0 0
        %2024 = vmatpush1.bf16.msra.mxu0 0
        %2025 = vmatprep.subr.bf16.mxu0 0
        %2026 = vmatpush1.bf16.msra.mxu0 0
        %2027 = vmatprep.subr.bf16.mxu0 0
        %2028 = vmatpush1.bf16.msra.mxu0 0
        %2029 = vmatprep.subr.bf16.mxu0 0
        %2030 = vmatpush1.bf16.msra.mxu0 0
        %2031 = vmatprep.subr.bf16.mxu0 0
        %2032 = vmatpush1.bf16.msra.mxu0 0
        %2033 = vmatprep.subr.bf16.mxu0 0
        %2034 = vmatpush1.bf16.msra.mxu0 0
        %2035 = vmatprep.subr.bf16.mxu0 0
        %2036 = vmatpush1.bf16.msra.mxu0 0
        %2037 = vmatprep.subr.bf16.mxu0 0
        %2038 = vmatpush1.bf16.msra.mxu0 0
        %2039 = vmatprep.subr.bf16.mxu0 0
        %2040 = vmatpush1.bf16.msra.mxu0 0
        %2041 = vmatprep.subr.bf16.mxu0 0
        %2042 = vmatpush1.bf16.msra.mxu0 0
        %2043 = vmatprep.mubr.bf16.mxu0 0
        %2044 = vmatmul.mubr.bf16.gmra.mrb[0].mxu0 %v2006
        %v2045 = vpop.f32.mrb[0].mxu0
        %v2046 = vadd.f32 0.0, %v2045
        %v2047 = vpop.f32.mrb[0].mxu0
        %v2048 = vpop.f32.mrb[0].mxu0
        %v2049 = vpop.f32.mrb[0].mxu0
        %2050 = vdwg.mxu0
        %v2052 = vsel %vm652, %v1524, 0
        %v2055 = vsel %vm1143, %v1540, 0
        %2057 = vmatprep.subr.bf16.mxu0 0
        %2058 = vmatpush1.bf16.msra.mxu0 %v2055
        %2059 = vmatprep.subr.bf16.mxu0 0
        %2060 = vmatpush1.bf16.msra.mxu0 0
        %2061 = vmatprep.subr.bf16.mxu0 0
        %2062 = vmatpush1.bf16.msra.mxu0 0
        %2063 = vmatprep.subr.bf16.mxu0 0
        %2064 = vmatpush1.bf16.msra.mxu0 0
        %2065 = vmatprep.subr.bf16.mxu0 0
        %2066 = vmatpush1.bf16.msra.mxu0 0
        %2067 = vmatprep.subr.bf16.mxu0 0
        %2068 = vmatpush1.bf16.msra.mxu0 0
        %2069 = vmatprep.subr.bf16.mxu0 0
        %2070 = vmatpush1.bf16.msra.mxu0 0
        %2071 = vmatprep.subr.bf16.mxu0 0
        %2072 = vmatpush1.bf16.msra.mxu0 0
        %2073 = vmatprep.subr.bf16.mxu0 0
        %2074 = vmatpush1.bf16.msra.mxu0 0
        %2075 = vmatprep.subr.bf16.mxu0 0
        %2076 = vmatpush1.bf16.msra.mxu0 0
        %2077 = vmatprep.subr.bf16.mxu0 0
        %2078 = vmatpush1.bf16.msra.mxu0 0
        %2079 = vmatprep.subr.bf16.mxu0 0
        %2080 = vmatpush1.bf16.msra.mxu0 0
        %2081 = vmatprep.subr.bf16.mxu0 0
        %2082 = vmatpush1.bf16.msra.mxu0 0
        %2083 = vmatprep.subr.bf16.mxu0 0
        %2084 = vmatpush1.bf16.msra.mxu0 0
        %2085 = vmatprep.subr.bf16.mxu0 0
        %2086 = vmatpush1.bf16.msra.mxu0 0
        %2087 = vmatprep.subr.bf16.mxu0 0
        %2088 = vmatpush1.bf16.msra.mxu0 0
        %2089 = vmatprep.mubr.bf16.mxu0 0
        %2090 = vmatmul.mubr.bf16.gmra.mrb[0].mxu0 %v2052
        %v2091 = vpop.f32.mrb[0].mxu0
        %v2092 = vadd.f32 0.0, %v2091
        %v2093 = vpop.f32.mrb[0].mxu0
        %v2094 = vpop.f32.mrb[0].mxu0
        %v2095 = vpop.f32.mrb[0].mxu0
        %2096 = vdwg.mxu0
        %v2098 = vsel %vm652, %v1525, 0
        %v2101 = vsel %vm1143, %v1541, 0
        %2103 = vmatprep.subr.bf16.mxu0 0
        %2104 = vmatpush1.bf16.msra.mxu0 %v2101
        %2105 = vmatprep.subr.bf16.mxu0 0
        %2106 = vmatpush1.bf16.msra.mxu0 0
        %2107 = vmatprep.subr.bf16.mxu0 0
        %2108 = vmatpush1.bf16.msra.mxu0 0
        %2109 = vmatprep.subr.bf16.mxu0 0
        %2110 = vmatpush1.bf16.msra.mxu0 0
        %2111 = vmatprep.subr.bf16.mxu0 0
        %2112 = vmatpush1.bf16.msra.mxu0 0
        %2113 = vmatprep.subr.bf16.mxu0 0
        %2114 = vmatpush1.bf16.msra.mxu0 0
        %2115 = vmatprep.subr.bf16.mxu0 0
        %2116 = vmatpush1.bf16.msra.mxu0 0
        %2117 = vmatprep.subr.bf16.mxu0 0
        %2118 = vmatpush1.bf16.msra.mxu0 0
        %2119 = vmatprep.subr.bf16.mxu0 0
        %2120 = vmatpush1.bf16.msra.mxu0 0
        %2121 = vmatprep.subr.bf16.mxu0 0
        %2122 = vmatpush1.bf16.msra.mxu0 0
        %2123 = vmatprep.subr.bf16.mxu0 0
        %2124 = vmatpush1.bf16.msra.mxu0 0
        %2125 = vmatprep.subr.bf16.mxu0 0
        %2126 = vmatpush1.bf16.msra.mxu0 0
        %2127 = vmatprep.subr.bf16.mxu0 0
        %2128 = vmatpush1.bf16.msra.mxu0 0
        %2129 = vmatprep.subr.bf16.mxu0 0
        %2130 = vmatpush1.bf16.msra.mxu0 0
        %2131 = vmatprep.subr.bf16.mxu0 0
        %2132 = vmatpush1.bf16.msra.mxu0 0
        %2133 = vmatprep.subr.bf16.mxu0 0
        %2134 = vmatpush1.bf16.msra.mxu0 0
        %2135 = vmatprep.mubr.bf16.mxu0 0
        %2136 = vmatmul.mubr.bf16.gmra.mrb[0].mxu0 %v2098
        %v2137 = vpop.f32.mrb[0].mxu0
        %v2138 = vadd.f32 0.0, %v2137
        %v2139 = vpop.f32.mrb[0].mxu0
        %v2140 = vpop.f32.mrb[0].mxu0
        %v2141 = vpop.f32.mrb[0].mxu0
        %2142 = vdwg.mxu0
        %v2144 = vsel %vm652, %v1526, 0
        %v2147 = vsel %vm1143, %v1542, 0
        %2149 = vmatprep.subr.bf16.mxu0 0
        %2150 = vmatpush1.bf16.msra.mxu0 %v2147
        %2151 = vmatprep.subr.bf16.mxu0 0
        %2152 = vmatpush1.bf16.msra.mxu0 0
        %2153 = vmatprep.subr.bf16.mxu0 0
        %2154 = vmatpush1.bf16.msra.mxu0 0
        %2155 = vmatprep.subr.bf16.mxu0 0
        %2156 = vmatpush1.bf16.msra.mxu0 0
        %2157 = vmatprep.subr.bf16.mxu0 0
        %2158 = vmatpush1.bf16.msra.mxu0 0
        %2159 = vmatprep.subr.bf16.mxu0 0
        %2160 = vmatpush1.bf16.msra.mxu0 0
        %2161 = vmatprep.subr.bf16.mxu0 0
        %2162 = vmatpush1.bf16.msra.mxu0 0
        %2163 = vmatprep.subr.bf16.mxu0 0
        %2164 = vmatpush1.bf16.msra.mxu0 0
        %2165 = vmatprep.subr.bf16.mxu0 0
        %2166 = vmatpush1.bf16.msra.mxu0 0
        %2167 = vmatprep.subr.bf16.mxu0 0
        %2168 = vmatpush1.bf16.msra.mxu0 0
        %2169 = vmatprep.subr.bf16.mxu0 0
        %2170 = vmatpush1.bf16.msra.mxu0 0
        %2171 = vmatprep.subr.bf16.mxu0 0
        %2172 = vmatpush1.bf16.msra.mxu0 0
        %2173 = vmatprep.subr.bf16.mxu0 0
        %2174 = vmatpush1.bf16.msra.mxu0 0
        %2175 = vmatprep.subr.bf16.mxu0 0
        %2176 = vmatpush1.bf16.msra.mxu0 0
        %2177 = vmatprep.subr.bf16.mxu0 0
        %2178 = vmatpush1.bf16.msra.mxu0 0
        %2179 = vmatprep.subr.bf16.mxu0 0
        %2180 = vmatpush1.bf16.msra.mxu0 0
        %2181 = vmatprep.mubr.bf16.mxu0 0
        %2182 = vmatmul.mubr.bf16.gmra.mrb[0].mxu0 %v2144
        %v2183 = vpop.f32.mrb[0].mxu0
        %v2184 = vadd.f32 0.0, %v2183
        %v2185 = vpop.f32.mrb[0].mxu0
        %v2186 = vpop.f32.mrb[0].mxu0
        %v2187 = vpop.f32.mrb[0].mxu0
        %2188 = vdwg.mxu0
        %v2190 = vsel %vm652, %v1527, 0
        %v2193 = vsel %vm1143, %v1543, 0
        %2195 = vmatprep.subr.bf16.mxu0 0
        %2196 = vmatpush1.bf16.msra.mxu0 %v2193
        %2197 = vmatprep.subr.bf16.mxu0 0
        %2198 = vmatpush1.bf16.msra.mxu0 0
        %2199 = vmatprep.subr.bf16.mxu0 0
        %2200 = vmatpush1.bf16.msra.mxu0 0
        %2201 = vmatprep.subr.bf16.mxu0 0
        %2202 = vmatpush1.bf16.msra.mxu0 0
        %2203 = vmatprep.subr.bf16.mxu0 0
        %2204 = vmatpush1.bf16.msra.mxu0 0
        %2205 = vmatprep.subr.bf16.mxu0 0
        %2206 = vmatpush1.bf16.msra.mxu0 0
        %2207 = vmatprep.subr.bf16.mxu0 0
        %2208 = vmatpush1.bf16.msra.mxu0 0
        %2209 = vmatprep.subr.bf16.mxu0 0
        %2210 = vmatpush1.bf16.msra.mxu0 0
        %2211 = vmatprep.subr.bf16.mxu0 0
        %2212 = vmatpush1.bf16.msra.mxu0 0
        %2213 = vmatprep.subr.bf16.mxu0 0
        %2214 = vmatpush1.bf16.msra.mxu0 0
        %2215 = vmatprep.subr.bf16.mxu0 0
        %2216 = vmatpush1.bf16.msra.mxu0 0
        %2217 = vmatprep.subr.bf16.mxu0 0
        %2218 = vmatpush1.bf16.msra.mxu0 0
        %2219 = vmatprep.subr.bf16.mxu0 0
        %2220 = vmatpush1.bf16.msra.mxu0 0
        %2221 = vmatprep.subr.bf16.mxu0 0
        %2222 = vmatpush1.bf16.msra.mxu0 0
        %2223 = vmatprep.subr.bf16.mxu0 0
        %2224 = vmatpush1.bf16.msra.mxu0 0
        %2225 = vmatprep.subr.bf16.mxu0 0
        %2226 = vmatpush1.bf16.msra.mxu0 0
        %2227 = vmatprep.mubr.bf16.mxu0 0
        %2228 = vmatmul.mubr.bf16.gmra.mrb[0].mxu0 %v2190
        %v2229 = vpop.f32.mrb[0].mxu0
        %v2230 = vadd.f32 0.0, %v2229
        %v2231 = vpop.f32.mrb[0].mxu0
        %v2232 = vpop.f32.mrb[0].mxu0
        %v2233 = vpop.f32.mrb[0].mxu0
        %2234 = vdwg.mxu0
        %v2236 = vsel %vm652, %v1528, 0
        %v2239 = vsel %vm1143, %v1544, 0
        %2241 = vmatprep.subr.bf16.mxu0 0
        %2242 = vmatpush1.bf16.msra.mxu0 %v2239
        %2243 = vmatprep.subr.bf16.mxu0 0
        %2244 = vmatpush1.bf16.msra.mxu0 0
        %2245 = vmatprep.subr.bf16.mxu0 0
        %2246 = vmatpush1.bf16.msra.mxu0 0
        %2247 = vmatprep.subr.bf16.mxu0 0
        %2248 = vmatpush1.bf16.msra.mxu0 0
        %2249 = vmatprep.subr.bf16.mxu0 0
        %2250 = vmatpush1.bf16.msra.mxu0 0
        %2251 = vmatprep.subr.bf16.mxu0 0
        %2252 = vmatpush1.bf16.msra.mxu0 0
        %2253 = vmatprep.subr.bf16.mxu0 0
        %2254 = vmatpush1.bf16.msra.mxu0 0
        %2255 = vmatprep.subr.bf16.mxu0 0
        %2256 = vmatpush1.bf16.msra.mxu0 0
        %2257 = vmatprep.subr.bf16.mxu0 0
        %2258 = vmatpush1.bf16.msra.mxu0 0
        %2259 = vmatprep.subr.bf16.mxu0 0
        %2260 = vmatpush1.bf16.msra.mxu0 0
        %2261 = vmatprep.subr.bf16.mxu0 0
        %2262 = vmatpush1.bf16.msra.mxu0 0
        %2263 = vmatprep.subr.bf16.mxu0 0
        %2264 = vmatpush1.bf16.msra.mxu0 0
        %2265 = vmatprep.subr.bf16.mxu0 0
        %2266 = vmatpush1.bf16.msra.mxu0 0
        %2267 = vmatprep.subr.bf16.mxu0 0
        %2268 = vmatpush1.bf16.msra.mxu0 0
        %2269 = vmatprep.subr.bf16.mxu0 0
        %2270 = vmatpush1.bf16.msra.mxu0 0
        %2271 = vmatprep.subr.bf16.mxu0 0
        %2272 = vmatpush1.bf16.msra.mxu0 0
        %2273 = vmatprep.mubr.bf16.mxu0 0
        %2274 = vmatmul.mubr.bf16.gmra.mrb[0].mxu0 %v2236
        %v2275 = vpop.f32.mrb[0].mxu0
        %v2276 = vadd.f32 0.0, %v2275
        %v2277 = vpop.f32.mrb[0].mxu0
        %v2278 = vpop.f32.mrb[0].mxu0
        %v2279 = vpop.f32.mrb[0].mxu0
        %2280 = vdwg.mxu0
        %vm2281 = vcmask 57344
        %2282 = vst.msk [vmem:[#allocation3] sm:$0x1] %vm2281, %v1586
        %2283 = vst.msk [vmem:[#allocation3 + $0x1] sm:$0x1] %vm2281, %v1632
        %2284 = vst.msk [vmem:[#allocation3 + $0x2] sm:$0x1] %vm2281, %v1678
        %2285 = vst.msk [vmem:[#allocation3 + $0x3] sm:$0x1] %vm2281, %v1724
        %2286 = vst.msk [vmem:[#allocation3 + $0x4] sm:$0x1] %vm2281, %v1770
        %2287 = vst.msk [vmem:[#allocation3 + $0x5] sm:$0x1] %vm2281, %v1816
        %2288 = vst.msk [vmem:[#allocation3 + $0x6] sm:$0x1] %vm2281, %v1862
        %2289 = vst.msk [vmem:[#allocation3 + $0x7] sm:$0x1] %vm2281, %v1908
        %2290 = vst.msk [vmem:[#allocation3 + $0x8] sm:$0x1] %vm2281, %v1954
        %2291 = vst.msk [vmem:[#allocation3 + $0x9] sm:$0x1] %vm2281, %v2000
        %2292 = vst.msk [vmem:[#allocation3 + $0xa] sm:$0x1] %vm2281, %v2046
        %2293 = vst.msk [vmem:[#allocation3 + $0xb] sm:$0x1] %vm2281, %v2092
        %2294 = vst.msk [vmem:[#allocation3 + $0xc] sm:$0x1] %vm2281, %v2138
        %2295 = vst.msk [vmem:[#allocation3 + $0xd] sm:$0x1] %vm2281, %v2184
        %2296 = vst.msk [vmem:[#allocation3 + $0xe] sm:$0x1] %vm2281, %v2230
        %2297 = vst.msk [vmem:[#allocation3 + $0xf] sm:$0x1] %vm2281, %v2276
        %v2298 = vld [vmem:[%s5] sm:$0xf]
        %v2299 = vld [vmem:[#allocation3] sm:$0x1]
        %v2300 = vld [vmem:[#allocation3 + $0x1] sm:$0x1]
        %v2301 = vld [vmem:[#allocation3 + $0x2] sm:$0x1]
        %v2302 = vld [vmem:[#allocation3 + $0x3] sm:$0x1]
        %v2303 = vld [vmem:[#allocation3 + $0x4] sm:$0x1]
        %v2304 = vld [vmem:[#allocation3 + $0x5] sm:$0x1]
        %v2305 = vld [vmem:[#allocation3 + $0x6] sm:$0x1]
        %v2306 = vld [vmem:[#allocation3 + $0x7] sm:$0x1]
        %v2307 = vld [vmem:[#allocation3 + $0x8] sm:$0x1]
        %v2308 = vld [vmem:[#allocation3 + $0x9] sm:$0x1]
        %v2309 = vld [vmem:[#allocation3 + $0xa] sm:$0x1]
        %v2310 = vld [vmem:[#allocation3 + $0xb] sm:$0x1]
        %v2311 = vld [vmem:[#allocation3 + $0xc] sm:$0x1]
        %v2312 = vld [vmem:[#allocation3 + $0xd] sm:$0x1]
        %v2313 = vld [vmem:[#allocation3 + $0xe] sm:$0x1]
        %v2314 = vld [vmem:[#allocation3 + $0xf] sm:$0x1]
        %v2315 = vpack.c.bf16 %v2299, %v2299
        %v2316 = vpack.c.bf16 %v2300, %v2300
        %v2317 = vpack.c.bf16 %v2301, %v2301
        %v2318 = vpack.c.bf16 %v2302, %v2302
        %v2319 = vpack.c.bf16 %v2303, %v2303
        %v2320 = vpack.c.bf16 %v2304, %v2304
        %v2321 = vpack.c.bf16 %v2305, %v2305
        %v2322 = vpack.c.bf16 %v2306, %v2306
        %v2323 = vpack.c.bf16 %v2307, %v2307
        %v2324 = vpack.c.bf16 %v2308, %v2308
        %v2325 = vpack.c.bf16 %v2309, %v2309
        %v2326 = vpack.c.bf16 %v2310, %v2310
        %v2327 = vpack.c.bf16 %v2311, %v2311
        %v2328 = vpack.c.bf16 %v2312, %v2312
        %v2329 = vpack.c.bf16 %v2313, %v2313
        %v2330 = vpack.c.bf16 %v2314, %v2314
        %v2347 = vunpack.c.l.b16 %v2315
        %v2348 = vunpack.c.l.b16 %v2316
        %v2349 = vunpack.c.l.b16 %v2317
        %v2350 = vunpack.c.l.b16 %v2318
        %v2351 = vunpack.c.l.b16 %v2319
        %v2352 = vunpack.c.l.b16 %v2320
        %v2353 = vunpack.c.l.b16 %v2321
        %v2354 = vunpack.c.l.b16 %v2322
        %v2355 = vunpack.c.l.b16 %v2323
        %v2356 = vunpack.c.l.b16 %v2324
        %v2357 = vunpack.c.l.b16 %v2325
        %v2358 = vunpack.c.l.b16 %v2326
        %v2359 = vunpack.c.l.b16 %v2327
        %v2360 = vunpack.c.l.b16 %v2328
        %v2361 = vunpack.c.l.b16 %v2329
        %v2362 = vunpack.c.l.b16 %v2330
        %v2363 = vrot.slane %v2348, 7
        %vm2364 = vcmask 1041409
        %v2365 = vsel %vm2364, %v2363, %v2347
        %v2366 = vrot.slane %v2349, 6
        %vm2367 = vcmask 1042434
        %v2368 = vsel %vm2367, %v2366, %v2365
        %v2369 = vrot.slane %v2350, 5
        %vm2370 = vcmask 1043459
        %v2371 = vsel %vm2370, %v2369, %v2368
        %v2372 = vrot.slane %v2351, 4
        %vm2373 = vcmask 1044484
        %v2374 = vsel %vm2373, %v2372, %v2371
        %v2375 = vrot.slane %v2352, 3
        %vm2376 = vcmask 1045509
        %v2377 = vsel %vm2376, %v2375, %v2374
        %v2378 = vrot.slane %v2353, 2
        %vm2379 = vcmask 1046534
        %v2380 = vsel %vm2379, %v2378, %v2377
        %v2381 = vrot.slane %v2354, 1
        %vm2382 = vcmask 1047559
        %v2383 = vsel %vm2382, %v2381, %v2380
        %v2384 = vrot.slane %v2356, 7
        %v2385 = vsel %vm2364, %v2384, %v2355
        %v2386 = vrot.slane %v2357, 6
        %v2387 = vsel %vm2367, %v2386, %v2385
        %v2388 = vrot.slane %v2358, 5
        %v2389 = vsel %vm2370, %v2388, %v2387
        %v2390 = vrot.slane %v2359, 4
        %v2391 = vsel %vm2373, %v2390, %v2389
        %v2392 = vrot.slane %v2360, 3
        %v2393 = vsel %vm2376, %v2392, %v2391
        %v2394 = vrot.slane %v2361, 2
        %v2395 = vsel %vm2379, %v2394, %v2393
        %v2396 = vrot.slane %v2362, 1
        %v2397 = vsel %vm2382, %v2396, %v2395
        %v2398 = vpack.c.b16 %v2397, %v2383
        %v2400 = vsel %vm652, %v2398, 0
        %v2403 = vsel %vm1143, %v2298, 0
        %2405 = vmatprep.subr.bf16.mxu0 0
        %2406 = vmatpush1.bf16.msra.mxu0 %v2403
        %2407 = vmatprep.subr.bf16.mxu0 0
        %2408 = vmatpush1.bf16.msra.mxu0 0
        %2409 = vmatprep.subr.bf16.mxu0 0
        %2410 = vmatpush1.bf16.msra.mxu0 0
        %2411 = vmatprep.subr.bf16.mxu0 0
        %2412 = vmatpush1.bf16.msra.mxu0 0
        %2413 = vmatprep.subr.bf16.mxu0 0
        %2414 = vmatpush1.bf16.msra.mxu0 0
        %2415 = vmatprep.subr.bf16.mxu0 0
        %2416 = vmatpush1.bf16.msra.mxu0 0
        %2417 = vmatprep.subr.bf16.mxu0 0
        %2418 = vmatpush1.bf16.msra.mxu0 0
        %2419 = vmatprep.subr.bf16.mxu0 0
        %2420 = vmatpush1.bf16.msra.mxu0 0
        %2421 = vmatprep.subr.bf16.mxu0 0
        %2422 = vmatpush1.bf16.msra.mxu0 0
        %2423 = vmatprep.subr.bf16.mxu0 0
        %2424 = vmatpush1.bf16.msra.mxu0 0
        %2425 = vmatprep.subr.bf16.mxu0 0
        %2426 = vmatpush1.bf16.msra.mxu0 0
        %2427 = vmatprep.subr.bf16.mxu0 0
        %2428 = vmatpush1.bf16.msra.mxu0 0
        %2429 = vmatprep.subr.bf16.mxu0 0
        %2430 = vmatpush1.bf16.msra.mxu0 0
        %2431 = vmatprep.subr.bf16.mxu0 0
        %2432 = vmatpush1.bf16.msra.mxu0 0
        %2433 = vmatprep.subr.bf16.mxu0 0
        %2434 = vmatpush1.bf16.msra.mxu0 0
        %2435 = vmatprep.subr.bf16.mxu0 0
        %2436 = vmatpush1.bf16.msra.mxu0 0
        %2437 = vmatprep.mubr.bf16.mxu0 0
        %2438 = vmatmul.mubr.bf16.gmra.mrb[0].mxu0 %v2400
        %v2439 = vpop.f32.mrb[0].mxu0
        %v2440 = vadd.f32 0.0, %v2439
        %v2441 = vpop.f32.mrb[0].mxu0
        %v2442 = vpop.f32.mrb[0].mxu0
        %v2443 = vadd.f32 0.0, %v2442
        %v2444 = vpop.f32.mrb[0].mxu0
        %2445 = vdwg.mxu0
        %2446 = vst [vmem:[%s311] sm:$0xff] %v2440
        %2447 = vst [vmem:[%s311 + $0x8] sm:$0xff] %v2443
        %s2448 = sand.u32 %s187, 1
        %s2449 = scalar_lea.sflag [#allocation5], %s2448
        %s2450 = sand.u32 %s187, 1
        %s2451 = smul.addr %s2450, 16
        %s2452 = scalar_lea.vmem [#allocation4], %s2451
        // Predicated region
        $region45: #{tpu_custom_call.1} parent=43 // pred_check
          %p2453 = pneg %p197
        $region46: #{tpu_custom_call.1} parent=43 // pred_check_branch
          %2455 = sbr.rel (%p2453) target = $region48
        $region47: #{tpu_custom_call.1} parent=43 // pred_region
          %s2456 = smul.u32 2, %s24
          %s2458 = ssub.s32 256, 256
          %2459 = vsyncadd %s2449, %s2458
          %s2460 = smul.addr %s25, 2
          %s2461 = sadd.s32 %s2456, %s2460
          %s2462 = smul.addr %s2461, 128
          %s2463 = scalar_lea.hbm %s6, %s2462
          %s2464 = sshll.u32 %s2452, 4
          %s2465 = int_to_ptr.vmem [resolvable:$true] %s2464
          %2470 = dma.vmem_to_hbm [thread:$0]  %s2465, 256, %s2463, %s2449, 128, 128, 8
        $region48: #{tpu_custom_call.1} parent=43 // pred_fallthru
          _
      $region44: #{tpu_custom_call.1} parent=5 // pred_fallthru
        _
      %p2471 = scmp.le.s32.totalorder 2, %s15
      // Predicated region
      $region49: #{tpu_custom_call.1} parent=5 // pred_check
        %p2472 = pneg %p2471
      $region50: #{tpu_custom_call.1} parent=5 // pred_check_branch
        %2474 = sbr.rel (%p2472) target = $region52
      $region51: #{tpu_custom_call.1} parent=5 // pred_region
        %s2475 = ssub.s32 %s15, 2
        // Predicated region
        $region53: #{tpu_custom_call.1} parent=51 // pred_check
          %p2476 = pneg %p203
        $region54: #{tpu_custom_call.1} parent=51 // pred_check_branch
          %2478 = sbr.rel (%p2476) target = $region56
        $region55: #{tpu_custom_call.1} parent=51 // pred_region
          %s2479 = sand.u32 %s188, 1
          %s2480 = scalar_lea.sflag [#allocation5], %s2479
          %s2481 = sand.u32 %s188, 1
          %s2482 = smul.addr %s2481, 16
          %s2483 = scalar_lea.vmem [#allocation4], %s2482
          %2484 = dma.done %s2480, 256
        $region56: #{tpu_custom_call.1} parent=51 // pred_fallthru
          _
      $region52: #{tpu_custom_call.1} parent=5 // pred_fallthru
        _
    $region6: #{tpu_custom_call.1} parent=1 // loop_footer
      %s19 = sadd.s32 1, %s15
    $region7: #{tpu_custom_call.1} parent=1 // loop_footer_branch
      %14 = sbr.rel target = $region3
    $region8: #{tpu_custom_call.1} parent=1 // loop_exit
      _
    %2485 = vsyncpa [#allocation5], 1
    %s2486 = scalar_lea.sflag [#allocation5], 1
    %2487 = vsyncpa %s2486, 1

</llo_original>
